<compile_context>
chip_gen: v7x
topology: tpu7x:2x2x1
jax: 0.10.0
libtpu: 0.0.40
codegen_flags: <defaults>
</compile_context>

<pallas_src>
import jax
import jax.numpy as jnp
from jax.experimental import pallas as pl
from jax.experimental.pallas import tpu as pltpu


def _round_up(x, m):
    return ((x + m - 1) // m) * m


# ----------------------------------------------------------------------------
# Fused LSTM (+pack_padded output semantics) + head projection kernel.
# Grid axis 0 iterates time blocks sequentially; h/c scratch persists across
# grid steps so the recurrence is preserved.
#
#   x_ref     : (TBLK*BP, D)  bf16   time-major rows (row = t*BP + b)
#   len_ref   : (BP, 1)       int32  valid lengths (padded rows = 0)
#   wih_ref   : (D, 4*HP)     bf16   gate-major, lane-padded input->gate weights
#   whh_ref   : (HP, 4*HP)    bf16   gate-major, lane-padded hidden->gate weights
#   b_ref     : (1, 4*HP)     f32    combined bias (b_ih + b_hh), lane-padded
#   whead_ref : (HP, OP)      bf16   head projection weights, padded
#   bhead_ref : (1, OP)       f32    head bias, padded
#   out_ref   : (TBLK*BP, OP) f32    per-step projected outputs
#   h_scr/c_scr : (BP, HP)    f32    persistent LSTM state
# ----------------------------------------------------------------------------
def lstm_head_kernel(x_ref, len_ref, wih_ref, whh_ref, b_ref, whead_ref,
                     bhead_ref, out_ref, h_scr, c_scr):
    BP, HP = h_scr.shape
    TB = x_ref.shape[0]
    TBLK = TB // BP

    tb = pl.program_id(0)

    @pl.when(tb == 0)
    def _init():
        h_scr[...] = jnp.zeros_like(h_scr)
        c_scr[...] = jnp.zeros_like(c_scr)

    lens = len_ref[...]                    # hoisted: one load per block
    whh = whh_ref[...]                     # hoisted: recurrent weights, bf16
    t0 = tb * TBLK

    # ---- batched input projection for the whole block: one MXU dot, bias
    # folded in, entirely off the serial h/c critical path. ----
    xw = jnp.dot(x_ref[...], wih_ref[...],
                 preferred_element_type=jnp.float32) + b_ref[...]   # (TB, 4HP) f32

    # ---- serial recurrence: h/c carried as values, one bf16 MXU dot/step.
    # Static unroll (TBLK <= 8); gate slices are 128-lane aligned vreg views,
    # per-step row slices of xw are whole (8,128) tiles. Gate order: i,f,g,o.
    h = h_scr[...]
    c = c_scr[...]
    h_outs = []
    for j in range(TBLK):
        gates = xw[j * BP:(j + 1) * BP, :] + jnp.dot(
            h.astype(jnp.bfloat16), whh,
            preferred_element_type=jnp.float32)                     # (BP, 4HP)
        i_g = jax.nn.sigmoid(gates[:, 0 * HP:1 * HP])
        f_g = jax.nn.sigmoid(gates[:, 1 * HP:2 * HP])
        g_g = jnp.tanh(gates[:, 2 * HP:3 * HP])
        o_g = jax.nn.sigmoid(gates[:, 3 * HP:4 * HP])

        c_new = f_g * c + i_g * g_g
        h_new = o_g * jnp.tanh(c_new)

        # pack_padded_sequence semantics: state frozen, output zeroed past len
        valid = (t0 + j) < lens                                     # (BP, 1)
        c = jnp.where(valid, c_new, c)
        h = jnp.where(valid, h_new, h)
        h_outs.append(jnp.where(valid, h_new, 0.0))

    # write state back once per block
    h_scr[...] = h
    c_scr[...] = c

    # ---- deferred batched head projection + single lane-dense store.
    # Concatenate is tile-aligned (each piece is exactly one (8,128) tile).
    h_blk = jnp.concatenate(h_outs, axis=0)                         # (TB, HP)
    out = jnp.dot(h_blk.astype(jnp.bfloat16), whead_ref[...],
                  preferred_element_type=jnp.float32) + bhead_ref[...]
    out_ref[...] = out.astype(out_ref.dtype)


# ----------------------------------------------------------------------------
# Weight repacking (layout plumbing only): gate-major 128-lane padding, bf16
# matmul operands, f32 biases. Padded columns/rows are zero so padded h/c
# lanes stay exactly 0 (bf16 zeros are exact).
# ----------------------------------------------------------------------------
def pack_params(params, H, O):
    HP = _round_up(H, 128)
    OP = _round_up(O, 128)

    def pad_gates(w, dtype):   # (rows, 4H) -> (rows, 4HP), each gate in its own HP slab
        rows = w.shape[0]
        out = jnp.zeros((rows, 4 * HP), dtype)
        for g in range(4):
            out = out.at[:, g * HP:g * HP + H].set(
                w[:, g * H:(g + 1) * H].astype(dtype))
        return out

    wih_p = pad_gates(params["w_ih"], jnp.bfloat16)                     # (D, 4HP)
    whh_p = jnp.zeros((HP, 4 * HP), jnp.bfloat16).at[:H, :].set(
        pad_gates(params["w_hh"], jnp.bfloat16))                        # (HP, 4HP)
    b_p = pad_gates(params["b"], jnp.float32)                           # (1, 4HP)
    whead_p = jnp.zeros((HP, OP), jnp.bfloat16).at[:H, :O].set(
        params["w_head"].astype(jnp.bfloat16))                          # (HP, OP)
    bhead_p = jnp.zeros((1, OP), jnp.float32).at[:, :O].set(
        params["b_head"].astype(jnp.float32))                           # (1, OP)
    return wih_p, whh_p, b_p, whead_p, bhead_p, HP, OP


# ----------------------------------------------------------------------------
# Wrapper: single fused pallas_call, grid over time blocks.
# ----------------------------------------------------------------------------
def gcn_map_forward(sequences, lengths, params, *, tblk_cap=8):
    B, T, D = sequences.shape
    H = params["w_hh"].shape[0]
    O = params["w_head"].shape[1]

    wih_p, whh_p, b_p, whead_p, bhead_p, HP, OP = pack_params(params, H, O)

    BP = _round_up(B, 8)                 # sublane-tile batch padding
    TBLK = min(T, tblk_cap)              # static unroll budget per block
    T_pad = _round_up(T, TBLK)
    nblk = T_pad // TBLK

    # time-major, zero-padded batch/time, flattened so row = t*BP + b: a time
    # block is then a contiguous, tile-aligned (TBLK*BP)-row slab.
    x_tm = jnp.transpose(sequences, (1, 0, 2)).astype(jnp.float32)      # (T, B, D)
    x_tm = jnp.pad(x_tm, ((0, T_pad - T), (0, BP - B), (0, 0)))
    x_flat = x_tm.reshape(T_pad * BP, D).astype(jnp.bfloat16)

    lens = jnp.pad(lengths.astype(jnp.int32).reshape(B),
                   (0, BP - B)).reshape(BP, 1)                          # pad rows: len=0

    whole = lambda t: (0, 0)

    out_flat = pl.pallas_call(
        lstm_head_kernel,
        out_shape=jax.ShapeDtypeStruct((T_pad * BP, OP), jnp.float32),
        grid=(nblk,),
        in_specs=[
            pl.BlockSpec((TBLK * BP, D), lambda t: (t, 0)),   # x time block
            pl.BlockSpec((BP, 1), whole),                     # lengths
            pl.BlockSpec((D, 4 * HP), whole),                 # W_ih (bf16, padded)
            pl.BlockSpec((HP, 4 * HP), whole),                # W_hh (bf16, padded)
            pl.BlockSpec((1, 4 * HP), whole),                 # bias (f32, padded)
            pl.BlockSpec((HP, OP), whole),                    # W_head (bf16, padded)
            pl.BlockSpec((1, OP), whole),                     # b_head (f32, padded)
        ],
        out_specs=pl.BlockSpec((TBLK * BP, OP), lambda t: (t, 0)),
        scratch_shapes=[
            pltpu.VMEM((BP, HP), jnp.float32),                # h state (persists)
            pltpu.VMEM((BP, HP), jnp.float32),                # c state (persists)
        ],
        compiler_params=pltpu.CompilerParams(
            dimension_semantics=("arbitrary",),               # serial recurrence
            vmem_limit_bytes=32 * 1024 * 1024,
        ),
    )(x_flat, lens, wih_p, whh_p, b_p, whead_p, bhead_p)

    # dropout: eval mode -> identity
    # TODO(synk): train-mode dropout mask not implemented

    # strip batch/time/lane padding, return batch-major (B, T, O)
    out = out_flat.reshape(T_pad, BP, OP)[:T, :B, :O]
    return jnp.transpose(out, (1, 0, 2))


# ----------------------------------------------------------------------------
# Deterministic synthetic parameters (PyTorch-style uniform(-1/sqrt(H), 1/sqrt(H))).
# ----------------------------------------------------------------------------
def init_params(key, D, H, O):
    k = 1.0 / jnp.sqrt(jnp.float32(H))
    keys = jax.random.split(key, 5)
    return {
        "w_ih": jax.random.uniform(keys[0], (D, 4 * H), jnp.float32, -k, k),
        "w_hh": jax.random.uniform(keys[1], (H, 4 * H), jnp.float32, -k, k),
        "b": jax.random.uniform(keys[2], (1, 4 * H), jnp.float32, -k, k),
        "w_head": jax.random.uniform(keys[3], (H, O), jnp.float32, -k, k),
        "b_head": jax.random.uniform(keys[4], (1, O), jnp.float32, -k, k),
    }


if __name__ == "__main__":
    B, T, D, H, O = 2, 8, 32, 32, 4

    key = jax.random.PRNGKey(0)
    k_x, k_p = jax.random.split(key)

    sequences = jax.random.normal(k_x, (B, T, D), jnp.float32)
    lengths = jnp.array([8, 5], dtype=jnp.int32)
    params = init_params(k_p, D, H, O)

    out = gcn_map_forward(sequences, lengths, params)
    jax.block_until_ready(out)
    assert out.shape == (B, T, O)
    print("KERNEL_OK")
</pallas_src>

<mosaic_0001>
module attributes {stable_mosaic.version = 11 : i64} {
  func.func @lstm_head_kernel(%arg0: i32, %arg1: memref<64x32xbf16, #tpu.memory_space<vmem>>, %arg2: memref<8x1xi32, #tpu.memory_space<vmem>>, %arg3: memref<32x512xbf16, #tpu.memory_space<vmem>>, %arg4: memref<128x512xbf16, #tpu.memory_space<vmem>>, %arg5: memref<1x512xf32, #tpu.memory_space<vmem>>, %arg6: memref<128x128xbf16, #tpu.memory_space<vmem>>, %arg7: memref<1x128xf32, #tpu.memory_space<vmem>>, %arg8: memref<64x128xf32, #tpu.memory_space<vmem>>, %arg9: memref<8x128xf32, #tpu.memory_space<vmem>>, %arg10: memref<8x128xf32, #tpu.memory_space<vmem>>) attributes {dimension_semantics = [#tpu.dimension_semantics<arbitrary>], iteration_bounds = array<i64: 1>, scalar_prefetch = 0 : i64, scratch_operands = 2 : i64, tpu.core_type = #tpu.core_type<tc>, window_params = [{transform_indices = @transform_0, window_bounds = array<i64: 64, 32>}, {pipeline_mode = #tpu.pipeline_mode<synchronous>, transform_indices = @transform_1, window_bounds = array<i64: 8, 1>}, {pipeline_mode = #tpu.pipeline_mode<synchronous>, transform_indices = @transform_2, window_bounds = array<i64: 32, 512>}, {pipeline_mode = #tpu.pipeline_mode<synchronous>, transform_indices = @transform_3, window_bounds = array<i64: 128, 512>}, {pipeline_mode = #tpu.pipeline_mode<synchronous>, transform_indices = @transform_4, window_bounds = array<i64: 1, 512>}, {pipeline_mode = #tpu.pipeline_mode<synchronous>, transform_indices = @transform_5, window_bounds = array<i64: 128, 128>}, {pipeline_mode = #tpu.pipeline_mode<synchronous>, transform_indices = @transform_6, window_bounds = array<i64: 1, 128>}, {transform_indices = @transform_7, window_bounds = array<i64: 64, 128>}]} {
    %c0_i32 = arith.constant 0 : i32
    %0 = arith.cmpi eq, %arg0, %c0_i32 : i32
    %1 = arith.extui %0 : i1 to i32
    %c0_i32_0 = arith.constant 0 : i32
    %2 = arith.cmpi ne, %1, %c0_i32_0 : i32
    scf.if %2 {
      %cst_66 = arith.constant 0.000000e+00 : f32
      %360 = vector.broadcast %cst_66 : f32 to vector<8x128xf32>
      %c0_67 = arith.constant 0 : index
      %c0_68 = arith.constant 0 : index
      %361 = vector.load %arg9[%c0_67, %c0_68] : memref<8x128xf32, #tpu.memory_space<vmem>>, vector<8x128xf32>
      tpu.vector_store %arg9[%c0_67, %c0_68], %360 {strides = array<i32>} : memref<8x128xf32, #tpu.memory_space<vmem>>, vector<8x128xf32>,
      %cst_69 = arith.constant 0.000000e+00 : f32
      %362 = vector.broadcast %cst_69 : f32 to vector<8x128xf32>
      %c0_70 = arith.constant 0 : index
      %c0_71 = arith.constant 0 : index
      %363 = vector.load %arg10[%c0_70, %c0_71] : memref<8x128xf32, #tpu.memory_space<vmem>>, vector<8x128xf32>
      tpu.vector_store %arg10[%c0_70, %c0_71], %362 {strides = array<i32>} : memref<8x128xf32, #tpu.memory_space<vmem>>, vector<8x128xf32>,
    } else {
    }
    %c0 = arith.constant 0 : index
    %c0_1 = arith.constant 0 : index
    %3 = vector.load %arg2[%c0, %c0_1] : memref<8x1xi32, #tpu.memory_space<vmem>>, vector<8x1xi32>
    %c0_2 = arith.constant 0 : index
    %c0_3 = arith.constant 0 : index
    %4 = vector.load %arg4[%c0_2, %c0_3] : memref<128x512xbf16, #tpu.memory_space<vmem>>, vector<128x512xbf16>
    %c8_i32 = arith.constant 8 : i32
    %5 = arith.muli %arg0, %c8_i32 : i32
    %c0_4 = arith.constant 0 : index
    %c0_5 = arith.constant 0 : index
    %6 = vector.load %arg1[%c0_4, %c0_5] : memref<64x32xbf16, #tpu.memory_space<vmem>>, vector<64x32xbf16>
    %c0_6 = arith.constant 0 : index
    %c0_7 = arith.constant 0 : index
    %7 = vector.load %arg3[%c0_6, %c0_7] : memref<32x512xbf16, #tpu.memory_space<vmem>>, vector<32x512xbf16>
    %cst = arith.constant dense<0.000000e+00> : vector<64x512xf32>
    %8 = tpu.matmul %6, %7, %cst {dimension_numbers = #tpu.dot_dimension_numbers<[1], [0], [0], [1], [0, 0, 1, 1], [], []>} : vector<64x32xbf16>, vector<32x512xbf16>, vector<64x512xf32> -> vector<64x512xf32>
    %c0_8 = arith.constant 0 : index
    %c0_9 = arith.constant 0 : index
    %9 = vector.load %arg5[%c0_8, %c0_9] : memref<1x512xf32, #tpu.memory_space<vmem>>, vector<1x512xf32>
    %10 = vector.broadcast %9 : vector<1x512xf32> to vector<64x512xf32>
    %11 = arith.addf %8, %10 : vector<64x512xf32>
    %c0_10 = arith.constant 0 : index
    %c0_11 = arith.constant 0 : index
    %12 = vector.load %arg9[%c0_10, %c0_11] : memref<8x128xf32, #tpu.memory_space<vmem>>, vector<8x128xf32>
    %c0_12 = arith.constant 0 : index
    %c0_13 = arith.constant 0 : index
    %13 = vector.load %arg10[%c0_12, %c0_13] : memref<8x128xf32, #tpu.memory_space<vmem>>, vector<8x128xf32>
    %14 = vector.extract_strided_slice %11 {offsets = [0, 0], sizes = [8, 512], strides = [1, 1]} : vector<64x512xf32> to vector<8x512xf32>
    %15 = arith.truncf %12 : vector<8x128xf32> to vector<8x128xbf16>
    %cst_14 = arith.constant dense<0.000000e+00> : vector<8x512xf32>
    %16 = tpu.matmul %15, %4, %cst_14 {dimension_numbers = #tpu.dot_dimension_numbers<[1], [0], [0], [1], [0, 0, 1, 1], [], []>} : vector<8x128xbf16>, vector<128x512xbf16>, vector<8x512xf32> -> vector<8x512xf32>
    %17 = arith.addf %14, %16 : vector<8x512xf32>
    %18 = vector.extract_strided_slice %17 {offsets = [0, 0], sizes = [8, 128], strides = [1, 1]} : vector<8x512xf32> to vector<8x128xf32>
    %19 = arith.negf %18 : vector<8x128xf32>
    %20 = math.exp %19 : vector<8x128xf32>
    %cst_15 = arith.constant 1.000000e+00 : f32
    %21 = vector.broadcast %cst_15 : f32 to vector<8x128xf32>
    %22 = arith.addf %21, %20 : vector<8x128xf32>
    %23 = arith.divf %21, %22 : vector<8x128xf32>
    %24 = vector.extract_strided_slice %17 {offsets = [0, 128], sizes = [8, 128], strides = [1, 1]} : vector<8x512xf32> to vector<8x128xf32>
    %25 = arith.negf %24 : vector<8x128xf32>
    %26 = math.exp %25 : vector<8x128xf32>
    %cst_16 = arith.constant 1.000000e+00 : f32
    %27 = vector.broadcast %cst_16 : f32 to vector<8x128xf32>
    %28 = arith.addf %27, %26 : vector<8x128xf32>
    %29 = arith.divf %27, %28 : vector<8x128xf32>
    %30 = vector.extract_strided_slice %17 {offsets = [0, 256], sizes = [8, 128], strides = [1, 1]} : vector<8x512xf32> to vector<8x128xf32>
    %31 = math.tanh %30 : vector<8x128xf32>
    %32 = vector.extract_strided_slice %17 {offsets = [0, 384], sizes = [8, 128], strides = [1, 1]} : vector<8x512xf32> to vector<8x128xf32>
    %33 = arith.negf %32 : vector<8x128xf32>
    %34 = math.exp %33 : vector<8x128xf32>
    %cst_17 = arith.constant 1.000000e+00 : f32
    %35 = vector.broadcast %cst_17 : f32 to vector<8x128xf32>
    %36 = arith.addf %35, %34 : vector<8x128xf32>
    %37 = arith.divf %35, %36 : vector<8x128xf32>
    %38 = arith.mulf %29, %13 : vector<8x128xf32>
    %39 = arith.mulf %23, %31 : vector<8x128xf32>
    %40 = arith.addf %38, %39 : vector<8x128xf32>
    %41 = math.tanh %40 : vector<8x128xf32>
    %42 = arith.mulf %37, %41 : vector<8x128xf32>
    %c0_i32_18 = arith.constant 0 : i32
    %43 = arith.addi %5, %c0_i32_18 : i32
    %44 = vector.broadcast %43 : i32 to vector<8x1xi32>
    %45 = arith.cmpi slt, %44, %3 : vector<8x1xi32>
    %46 = vector.shape_cast %45 : vector<8x1xi1> to vector<8x1xi1>
    %47 = vector.broadcast %46 : vector<8x1xi1> to vector<8x128xi1>
    %48 = arith.select %47, %40, %13 : vector<8x128xi1>, vector<8x128xf32>
    %49 = vector.shape_cast %45 : vector<8x1xi1> to vector<8x1xi1>
    %50 = vector.broadcast %49 : vector<8x1xi1> to vector<8x128xi1>
    %51 = arith.select %50, %42, %12 : vector<8x128xi1>, vector<8x128xf32>
    %cst_19 = arith.constant 0.000000e+00 : f32
    %52 = vector.shape_cast %45 : vector<8x1xi1> to vector<8x1xi1>
    %53 = vector.broadcast %52 : vector<8x1xi1> to vector<8x128xi1>
    %54 = vector.broadcast %cst_19 : f32 to vector<8x128xf32>
    %55 = arith.select %53, %42, %54 : vector<8x128xi1>, vector<8x128xf32>
    %56 = vector.extract_strided_slice %11 {offsets = [8, 0], sizes = [8, 512], strides = [1, 1]} : vector<64x512xf32> to vector<8x512xf32>
    %57 = arith.truncf %51 : vector<8x128xf32> to vector<8x128xbf16>
    %cst_20 = arith.constant dense<0.000000e+00> : vector<8x512xf32>
    %58 = tpu.matmul %57, %4, %cst_20 {dimension_numbers = #tpu.dot_dimension_numbers<[1], [0], [0], [1], [0, 0, 1, 1], [], []>} : vector<8x128xbf16>, vector<128x512xbf16>, vector<8x512xf32> -> vector<8x512xf32>
    %59 = arith.addf %56, %58 : vector<8x512xf32>
    %60 = vector.extract_strided_slice %59 {offsets = [0, 0], sizes = [8, 128], strides = [1, 1]} : vector<8x512xf32> to vector<8x128xf32>
    %61 = arith.negf %60 : vector<8x128xf32>
    %62 = math.exp %61 : vector<8x128xf32>
    %cst_21 = arith.constant 1.000000e+00 : f32
    %63 = vector.broadcast %cst_21 : f32 to vector<8x128xf32>
    %64 = arith.addf %63, %62 : vector<8x128xf32>
    %65 = arith.divf %63, %64 : vector<8x128xf32>
    %66 = vector.extract_strided_slice %59 {offsets = [0, 128], sizes = [8, 128], strides = [1, 1]} : vector<8x512xf32> to vector<8x128xf32>
    %67 = arith.negf %66 : vector<8x128xf32>
    %68 = math.exp %67 : vector<8x128xf32>
    %cst_22 = arith.constant 1.000000e+00 : f32
    %69 = vector.broadcast %cst_22 : f32 to vector<8x128xf32>
    %70 = arith.addf %69, %68 : vector<8x128xf32>
    %71 = arith.divf %69, %70 : vector<8x128xf32>
    %72 = vector.extract_strided_slice %59 {offsets = [0, 256], sizes = [8, 128], strides = [1, 1]} : vector<8x512xf32> to vector<8x128xf32>
    %73 = math.tanh %72 : vector<8x128xf32>
    %74 = vector.extract_strided_slice %59 {offsets = [0, 384], sizes = [8, 128], strides = [1, 1]} : vector<8x512xf32> to vector<8x128xf32>
    %75 = arith.negf %74 : vector<8x128xf32>
    %76 = math.exp %75 : vector<8x128xf32>
    %cst_23 = arith.constant 1.000000e+00 : f32
    %77 = vector.broadcast %cst_23 : f32 to vector<8x128xf32>
    %78 = arith.addf %77, %76 : vector<8x128xf32>
    %79 = arith.divf %77, %78 : vector<8x128xf32>
    %80 = arith.mulf %71, %48 : vector<8x128xf32>
    %81 = arith.mulf %65, %73 : vector<8x128xf32>
    %82 = arith.addf %80, %81 : vector<8x128xf32>
    %83 = math.tanh %82 : vector<8x128xf32>
    %84 = arith.mulf %79, %83 : vector<8x128xf32>
    %c1_i32 = arith.constant 1 : i32
    %85 = arith.addi %5, %c1_i32 : i32
    %86 = vector.broadcast %85 : i32 to vector<8x1xi32>
    %87 = arith.cmpi slt, %86, %3 : vector<8x1xi32>
    %88 = vector.shape_cast %87 : vector<8x1xi1> to vector<8x1xi1>
    %89 = vector.broadcast %88 : vector<8x1xi1> to vector<8x128xi1>
    %90 = arith.select %89, %82, %48 : vector<8x128xi1>, vector<8x128xf32>
    %91 = vector.shape_cast %87 : vector<8x1xi1> to vector<8x1xi1>
    %92 = vector.broadcast %91 : vector<8x1xi1> to vector<8x128xi1>
    %93 = arith.select %92, %84, %51 : vector<8x128xi1>, vector<8x128xf32>
    %cst_24 = arith.constant 0.000000e+00 : f32
    %94 = vector.shape_cast %87 : vector<8x1xi1> to vector<8x1xi1>
    %95 = vector.broadcast %94 : vector<8x1xi1> to vector<8x128xi1>
    %96 = vector.broadcast %cst_24 : f32 to vector<8x128xf32>
    %97 = arith.select %95, %84, %96 : vector<8x128xi1>, vector<8x128xf32>
    %98 = vector.extract_strided_slice %11 {offsets = [16, 0], sizes = [8, 512], strides = [1, 1]} : vector<64x512xf32> to vector<8x512xf32>
    %99 = arith.truncf %93 : vector<8x128xf32> to vector<8x128xbf16>
    %cst_25 = arith.constant dense<0.000000e+00> : vector<8x512xf32>
    %100 = tpu.matmul %99, %4, %cst_25 {dimension_numbers = #tpu.dot_dimension_numbers<[1], [0], [0], [1], [0, 0, 1, 1], [], []>} : vector<8x128xbf16>, vector<128x512xbf16>, vector<8x512xf32> -> vector<8x512xf32>
    %101 = arith.addf %98, %100 : vector<8x512xf32>
    %102 = vector.extract_strided_slice %101 {offsets = [0, 0], sizes = [8, 128], strides = [1, 1]} : vector<8x512xf32> to vector<8x128xf32>
    %103 = arith.negf %102 : vector<8x128xf32>
    %104 = math.exp %103 : vector<8x128xf32>
    %cst_26 = arith.constant 1.000000e+00 : f32
    %105 = vector.broadcast %cst_26 : f32 to vector<8x128xf32>
    %106 = arith.addf %105, %104 : vector<8x128xf32>
    %107 = arith.divf %105, %106 : vector<8x128xf32>
    %108 = vector.extract_strided_slice %101 {offsets = [0, 128], sizes = [8, 128], strides = [1, 1]} : vector<8x512xf32> to vector<8x128xf32>
    %109 = arith.negf %108 : vector<8x128xf32>
    %110 = math.exp %109 : vector<8x128xf32>
    %cst_27 = arith.constant 1.000000e+00 : f32
    %111 = vector.broadcast %cst_27 : f32 to vector<8x128xf32>
    %112 = arith.addf %111, %110 : vector<8x128xf32>
    %113 = arith.divf %111, %112 : vector<8x128xf32>
    %114 = vector.extract_strided_slice %101 {offsets = [0, 256], sizes = [8, 128], strides = [1, 1]} : vector<8x512xf32> to vector<8x128xf32>
    %115 = math.tanh %114 : vector<8x128xf32>
    %116 = vector.extract_strided_slice %101 {offsets = [0, 384], sizes = [8, 128], strides = [1, 1]} : vector<8x512xf32> to vector<8x128xf32>
    %117 = arith.negf %116 : vector<8x128xf32>
    %118 = math.exp %117 : vector<8x128xf32>
    %cst_28 = arith.constant 1.000000e+00 : f32
    %119 = vector.broadcast %cst_28 : f32 to vector<8x128xf32>
    %120 = arith.addf %119, %118 : vector<8x128xf32>
    %121 = arith.divf %119, %120 : vector<8x128xf32>
    %122 = arith.mulf %113, %90 : vector<8x128xf32>
    %123 = arith.mulf %107, %115 : vector<8x128xf32>
    %124 = arith.addf %122, %123 : vector<8x128xf32>
    %125 = math.tanh %124 : vector<8x128xf32>
    %126 = arith.mulf %121, %125 : vector<8x128xf32>
    %c2_i32 = arith.constant 2 : i32
    %127 = arith.addi %5, %c2_i32 : i32
    %128 = vector.broadcast %127 : i32 to vector<8x1xi32>
    %129 = arith.cmpi slt, %128, %3 : vector<8x1xi32>
    %130 = vector.shape_cast %129 : vector<8x1xi1> to vector<8x1xi1>
    %131 = vector.broadcast %130 : vector<8x1xi1> to vector<8x128xi1>
    %132 = arith.select %131, %124, %90 : vector<8x128xi1>, vector<8x128xf32>
    %133 = vector.shape_cast %129 : vector<8x1xi1> to vector<8x1xi1>
    %134 = vector.broadcast %133 : vector<8x1xi1> to vector<8x128xi1>
    %135 = arith.select %134, %126, %93 : vector<8x128xi1>, vector<8x128xf32>
    %cst_29 = arith.constant 0.000000e+00 : f32
    %136 = vector.shape_cast %129 : vector<8x1xi1> to vector<8x1xi1>
    %137 = vector.broadcast %136 : vector<8x1xi1> to vector<8x128xi1>
    %138 = vector.broadcast %cst_29 : f32 to vector<8x128xf32>
    %139 = arith.select %137, %126, %138 : vector<8x128xi1>, vector<8x128xf32>
    %140 = vector.extract_strided_slice %11 {offsets = [24, 0], sizes = [8, 512], strides = [1, 1]} : vector<64x512xf32> to vector<8x512xf32>
    %141 = arith.truncf %135 : vector<8x128xf32> to vector<8x128xbf16>
    %cst_30 = arith.constant dense<0.000000e+00> : vector<8x512xf32>
    %142 = tpu.matmul %141, %4, %cst_30 {dimension_numbers = #tpu.dot_dimension_numbers<[1], [0], [0], [1], [0, 0, 1, 1], [], []>} : vector<8x128xbf16>, vector<128x512xbf16>, vector<8x512xf32> -> vector<8x512xf32>
    %143 = arith.addf %140, %142 : vector<8x512xf32>
    %144 = vector.extract_strided_slice %143 {offsets = [0, 0], sizes = [8, 128], strides = [1, 1]} : vector<8x512xf32> to vector<8x128xf32>
    %145 = arith.negf %144 : vector<8x128xf32>
    %146 = math.exp %145 : vector<8x128xf32>
    %cst_31 = arith.constant 1.000000e+00 : f32
    %147 = vector.broadcast %cst_31 : f32 to vector<8x128xf32>
    %148 = arith.addf %147, %146 : vector<8x128xf32>
    %149 = arith.divf %147, %148 : vector<8x128xf32>
    %150 = vector.extract_strided_slice %143 {offsets = [0, 128], sizes = [8, 128], strides = [1, 1]} : vector<8x512xf32> to vector<8x128xf32>
    %151 = arith.negf %150 : vector<8x128xf32>
    %152 = math.exp %151 : vector<8x128xf32>
    %cst_32 = arith.constant 1.000000e+00 : f32
    %153 = vector.broadcast %cst_32 : f32 to vector<8x128xf32>
    %154 = arith.addf %153, %152 : vector<8x128xf32>
    %155 = arith.divf %153, %154 : vector<8x128xf32>
    %156 = vector.extract_strided_slice %143 {offsets = [0, 256], sizes = [8, 128], strides = [1, 1]} : vector<8x512xf32> to vector<8x128xf32>
    %157 = math.tanh %156 : vector<8x128xf32>
    %158 = vector.extract_strided_slice %143 {offsets = [0, 384], sizes = [8, 128], strides = [1, 1]} : vector<8x512xf32> to vector<8x128xf32>
    %159 = arith.negf %158 : vector<8x128xf32>
    %160 = math.exp %159 : vector<8x128xf32>
    %cst_33 = arith.constant 1.000000e+00 : f32
    %161 = vector.broadcast %cst_33 : f32 to vector<8x128xf32>
    %162 = arith.addf %161, %160 : vector<8x128xf32>
    %163 = arith.divf %161, %162 : vector<8x128xf32>
    %164 = arith.mulf %155, %132 : vector<8x128xf32>
    %165 = arith.mulf %149, %157 : vector<8x128xf32>
    %166 = arith.addf %164, %165 : vector<8x128xf32>
    %167 = math.tanh %166 : vector<8x128xf32>
    %168 = arith.mulf %163, %167 : vector<8x128xf32>
    %c3_i32 = arith.constant 3 : i32
    %169 = arith.addi %5, %c3_i32 : i32
    %170 = vector.broadcast %169 : i32 to vector<8x1xi32>
    %171 = arith.cmpi slt, %170, %3 : vector<8x1xi32>
    %172 = vector.shape_cast %171 : vector<8x1xi1> to vector<8x1xi1>
    %173 = vector.broadcast %172 : vector<8x1xi1> to vector<8x128xi1>
    %174 = arith.select %173, %166, %132 : vector<8x128xi1>, vector<8x128xf32>
    %175 = vector.shape_cast %171 : vector<8x1xi1> to vector<8x1xi1>
    %176 = vector.broadcast %175 : vector<8x1xi1> to vector<8x128xi1>
    %177 = arith.select %176, %168, %135 : vector<8x128xi1>, vector<8x128xf32>
    %cst_34 = arith.constant 0.000000e+00 : f32
    %178 = vector.shape_cast %171 : vector<8x1xi1> to vector<8x1xi1>
    %179 = vector.broadcast %178 : vector<8x1xi1> to vector<8x128xi1>
    %180 = vector.broadcast %cst_34 : f32 to vector<8x128xf32>
    %181 = arith.select %179, %168, %180 : vector<8x128xi1>, vector<8x128xf32>
    %182 = vector.extract_strided_slice %11 {offsets = [32, 0], sizes = [8, 512], strides = [1, 1]} : vector<64x512xf32> to vector<8x512xf32>
    %183 = arith.truncf %177 : vector<8x128xf32> to vector<8x128xbf16>
    %cst_35 = arith.constant dense<0.000000e+00> : vector<8x512xf32>
    %184 = tpu.matmul %183, %4, %cst_35 {dimension_numbers = #tpu.dot_dimension_numbers<[1], [0], [0], [1], [0, 0, 1, 1], [], []>} : vector<8x128xbf16>, vector<128x512xbf16>, vector<8x512xf32> -> vector<8x512xf32>
    %185 = arith.addf %182, %184 : vector<8x512xf32>
    %186 = vector.extract_strided_slice %185 {offsets = [0, 0], sizes = [8, 128], strides = [1, 1]} : vector<8x512xf32> to vector<8x128xf32>
    %187 = arith.negf %186 : vector<8x128xf32>
    %188 = math.exp %187 : vector<8x128xf32>
    %cst_36 = arith.constant 1.000000e+00 : f32
    %189 = vector.broadcast %cst_36 : f32 to vector<8x128xf32>
    %190 = arith.addf %189, %188 : vector<8x128xf32>
    %191 = arith.divf %189, %190 : vector<8x128xf32>
    %192 = vector.extract_strided_slice %185 {offsets = [0, 128], sizes = [8, 128], strides = [1, 1]} : vector<8x512xf32> to vector<8x128xf32>
    %193 = arith.negf %192 : vector<8x128xf32>
    %194 = math.exp %193 : vector<8x128xf32>
    %cst_37 = arith.constant 1.000000e+00 : f32
    %195 = vector.broadcast %cst_37 : f32 to vector<8x128xf32>
    %196 = arith.addf %195, %194 : vector<8x128xf32>
    %197 = arith.divf %195, %196 : vector<8x128xf32>
    %198 = vector.extract_strided_slice %185 {offsets = [0, 256], sizes = [8, 128], strides = [1, 1]} : vector<8x512xf32> to vector<8x128xf32>
    %199 = math.tanh %198 : vector<8x128xf32>
    %200 = vector.extract_strided_slice %185 {offsets = [0, 384], sizes = [8, 128], strides = [1, 1]} : vector<8x512xf32> to vector<8x128xf32>
    %201 = arith.negf %200 : vector<8x128xf32>
    %202 = math.exp %201 : vector<8x128xf32>
    %cst_38 = arith.constant 1.000000e+00 : f32
    %203 = vector.broadcast %cst_38 : f32 to vector<8x128xf32>
    %204 = arith.addf %203, %202 : vector<8x128xf32>
    %205 = arith.divf %203, %204 : vector<8x128xf32>
    %206 = arith.mulf %197, %174 : vector<8x128xf32>
    %207 = arith.mulf %191, %199 : vector<8x128xf32>
    %208 = arith.addf %206, %207 : vector<8x128xf32>
    %209 = math.tanh %208 : vector<8x128xf32>
    %210 = arith.mulf %205, %209 : vector<8x128xf32>
    %c4_i32 = arith.constant 4 : i32
    %211 = arith.addi %5, %c4_i32 : i32
    %212 = vector.broadcast %211 : i32 to vector<8x1xi32>
    %213 = arith.cmpi slt, %212, %3 : vector<8x1xi32>
    %214 = vector.shape_cast %213 : vector<8x1xi1> to vector<8x1xi1>
    %215 = vector.broadcast %214 : vector<8x1xi1> to vector<8x128xi1>
    %216 = arith.select %215, %208, %174 : vector<8x128xi1>, vector<8x128xf32>
    %217 = vector.shape_cast %213 : vector<8x1xi1> to vector<8x1xi1>
    %218 = vector.broadcast %217 : vector<8x1xi1> to vector<8x128xi1>
    %219 = arith.select %218, %210, %177 : vector<8x128xi1>, vector<8x128xf32>
    %cst_39 = arith.constant 0.000000e+00 : f32
    %220 = vector.shape_cast %213 : vector<8x1xi1> to vector<8x1xi1>
    %221 = vector.broadcast %220 : vector<8x1xi1> to vector<8x128xi1>
    %222 = vector.broadcast %cst_39 : f32 to vector<8x128xf32>
    %223 = arith.select %221, %210, %222 : vector<8x128xi1>, vector<8x128xf32>
    %224 = vector.extract_strided_slice %11 {offsets = [40, 0], sizes = [8, 512], strides = [1, 1]} : vector<64x512xf32> to vector<8x512xf32>
    %225 = arith.truncf %219 : vector<8x128xf32> to vector<8x128xbf16>
    %cst_40 = arith.constant dense<0.000000e+00> : vector<8x512xf32>
    %226 = tpu.matmul %225, %4, %cst_40 {dimension_numbers = #tpu.dot_dimension_numbers<[1], [0], [0], [1], [0, 0, 1, 1], [], []>} : vector<8x128xbf16>, vector<128x512xbf16>, vector<8x512xf32> -> vector<8x512xf32>
    %227 = arith.addf %224, %226 : vector<8x512xf32>
    %228 = vector.extract_strided_slice %227 {offsets = [0, 0], sizes = [8, 128], strides = [1, 1]} : vector<8x512xf32> to vector<8x128xf32>
    %229 = arith.negf %228 : vector<8x128xf32>
    %230 = math.exp %229 : vector<8x128xf32>
    %cst_41 = arith.constant 1.000000e+00 : f32
    %231 = vector.broadcast %cst_41 : f32 to vector<8x128xf32>
    %232 = arith.addf %231, %230 : vector<8x128xf32>
    %233 = arith.divf %231, %232 : vector<8x128xf32>
    %234 = vector.extract_strided_slice %227 {offsets = [0, 128], sizes = [8, 128], strides = [1, 1]} : vector<8x512xf32> to vector<8x128xf32>
    %235 = arith.negf %234 : vector<8x128xf32>
    %236 = math.exp %235 : vector<8x128xf32>
    %cst_42 = arith.constant 1.000000e+00 : f32
    %237 = vector.broadcast %cst_42 : f32 to vector<8x128xf32>
    %238 = arith.addf %237, %236 : vector<8x128xf32>
    %239 = arith.divf %237, %238 : vector<8x128xf32>
    %240 = vector.extract_strided_slice %227 {offsets = [0, 256], sizes = [8, 128], strides = [1, 1]} : vector<8x512xf32> to vector<8x128xf32>
    %241 = math.tanh %240 : vector<8x128xf32>
    %242 = vector.extract_strided_slice %227 {offsets = [0, 384], sizes = [8, 128], strides = [1, 1]} : vector<8x512xf32> to vector<8x128xf32>
    %243 = arith.negf %242 : vector<8x128xf32>
    %244 = math.exp %243 : vector<8x128xf32>
    %cst_43 = arith.constant 1.000000e+00 : f32
    %245 = vector.broadcast %cst_43 : f32 to vector<8x128xf32>
    %246 = arith.addf %245, %244 : vector<8x128xf32>
    %247 = arith.divf %245, %246 : vector<8x128xf32>
    %248 = arith.mulf %239, %216 : vector<8x128xf32>
    %249 = arith.mulf %233, %241 : vector<8x128xf32>
    %250 = arith.addf %248, %249 : vector<8x128xf32>
    %251 = math.tanh %250 : vector<8x128xf32>
    %252 = arith.mulf %247, %251 : vector<8x128xf32>
    %c5_i32 = arith.constant 5 : i32
    %253 = arith.addi %5, %c5_i32 : i32
    %254 = vector.broadcast %253 : i32 to vector<8x1xi32>
    %255 = arith.cmpi slt, %254, %3 : vector<8x1xi32>
    %256 = vector.shape_cast %255 : vector<8x1xi1> to vector<8x1xi1>
    %257 = vector.broadcast %256 : vector<8x1xi1> to vector<8x128xi1>
    %258 = arith.select %257, %250, %216 : vector<8x128xi1>, vector<8x128xf32>
    %259 = vector.shape_cast %255 : vector<8x1xi1> to vector<8x1xi1>
    %260 = vector.broadcast %259 : vector<8x1xi1> to vector<8x128xi1>
    %261 = arith.select %260, %252, %219 : vector<8x128xi1>, vector<8x128xf32>
    %cst_44 = arith.constant 0.000000e+00 : f32
    %262 = vector.shape_cast %255 : vector<8x1xi1> to vector<8x1xi1>
    %263 = vector.broadcast %262 : vector<8x1xi1> to vector<8x128xi1>
    %264 = vector.broadcast %cst_44 : f32 to vector<8x128xf32>
    %265 = arith.select %263, %252, %264 : vector<8x128xi1>, vector<8x128xf32>
    %266 = vector.extract_strided_slice %11 {offsets = [48, 0], sizes = [8, 512], strides = [1, 1]} : vector<64x512xf32> to vector<8x512xf32>
    %267 = arith.truncf %261 : vector<8x128xf32> to vector<8x128xbf16>
    %cst_45 = arith.constant dense<0.000000e+00> : vector<8x512xf32>
    %268 = tpu.matmul %267, %4, %cst_45 {dimension_numbers = #tpu.dot_dimension_numbers<[1], [0], [0], [1], [0, 0, 1, 1], [], []>} : vector<8x128xbf16>, vector<128x512xbf16>, vector<8x512xf32> -> vector<8x512xf32>
    %269 = arith.addf %266, %268 : vector<8x512xf32>
    %270 = vector.extract_strided_slice %269 {offsets = [0, 0], sizes = [8, 128], strides = [1, 1]} : vector<8x512xf32> to vector<8x128xf32>
    %271 = arith.negf %270 : vector<8x128xf32>
    %272 = math.exp %271 : vector<8x128xf32>
    %cst_46 = arith.constant 1.000000e+00 : f32
    %273 = vector.broadcast %cst_46 : f32 to vector<8x128xf32>
    %274 = arith.addf %273, %272 : vector<8x128xf32>
    %275 = arith.divf %273, %274 : vector<8x128xf32>
    %276 = vector.extract_strided_slice %269 {offsets = [0, 128], sizes = [8, 128], strides = [1, 1]} : vector<8x512xf32> to vector<8x128xf32>
    %277 = arith.negf %276 : vector<8x128xf32>
    %278 = math.exp %277 : vector<8x128xf32>
    %cst_47 = arith.constant 1.000000e+00 : f32
    %279 = vector.broadcast %cst_47 : f32 to vector<8x128xf32>
    %280 = arith.addf %279, %278 : vector<8x128xf32>
    %281 = arith.divf %279, %280 : vector<8x128xf32>
    %282 = vector.extract_strided_slice %269 {offsets = [0, 256], sizes = [8, 128], strides = [1, 1]} : vector<8x512xf32> to vector<8x128xf32>
    %283 = math.tanh %282 : vector<8x128xf32>
    %284 = vector.extract_strided_slice %269 {offsets = [0, 384], sizes = [8, 128], strides = [1, 1]} : vector<8x512xf32> to vector<8x128xf32>
    %285 = arith.negf %284 : vector<8x128xf32>
    %286 = math.exp %285 : vector<8x128xf32>
    %cst_48 = arith.constant 1.000000e+00 : f32
    %287 = vector.broadcast %cst_48 : f32 to vector<8x128xf32>
    %288 = arith.addf %287, %286 : vector<8x128xf32>
    %289 = arith.divf %287, %288 : vector<8x128xf32>
    %290 = arith.mulf %281, %258 : vector<8x128xf32>
    %291 = arith.mulf %275, %283 : vector<8x128xf32>
    %292 = arith.addf %290, %291 : vector<8x128xf32>
    %293 = math.tanh %292 : vector<8x128xf32>
    %294 = arith.mulf %289, %293 : vector<8x128xf32>
    %c6_i32 = arith.constant 6 : i32
    %295 = arith.addi %5, %c6_i32 : i32
    %296 = vector.broadcast %295 : i32 to vector<8x1xi32>
    %297 = arith.cmpi slt, %296, %3 : vector<8x1xi32>
    %298 = vector.shape_cast %297 : vector<8x1xi1> to vector<8x1xi1>
    %299 = vector.broadcast %298 : vector<8x1xi1> to vector<8x128xi1>
    %300 = arith.select %299, %292, %258 : vector<8x128xi1>, vector<8x128xf32>
    %301 = vector.shape_cast %297 : vector<8x1xi1> to vector<8x1xi1>
    %302 = vector.broadcast %301 : vector<8x1xi1> to vector<8x128xi1>
    %303 = arith.select %302, %294, %261 : vector<8x128xi1>, vector<8x128xf32>
    %cst_49 = arith.constant 0.000000e+00 : f32
    %304 = vector.shape_cast %297 : vector<8x1xi1> to vector<8x1xi1>
    %305 = vector.broadcast %304 : vector<8x1xi1> to vector<8x128xi1>
    %306 = vector.broadcast %cst_49 : f32 to vector<8x128xf32>
    %307 = arith.select %305, %294, %306 : vector<8x128xi1>, vector<8x128xf32>
    %308 = vector.extract_strided_slice %11 {offsets = [56, 0], sizes = [8, 512], strides = [1, 1]} : vector<64x512xf32> to vector<8x512xf32>
    %309 = arith.truncf %303 : vector<8x128xf32> to vector<8x128xbf16>
    %cst_50 = arith.constant dense<0.000000e+00> : vector<8x512xf32>
    %310 = tpu.matmul %309, %4, %cst_50 {dimension_numbers = #tpu.dot_dimension_numbers<[1], [0], [0], [1], [0, 0, 1, 1], [], []>} : vector<8x128xbf16>, vector<128x512xbf16>, vector<8x512xf32> -> vector<8x512xf32>
    %311 = arith.addf %308, %310 : vector<8x512xf32>
    %312 = vector.extract_strided_slice %311 {offsets = [0, 0], sizes = [8, 128], strides = [1, 1]} : vector<8x512xf32> to vector<8x128xf32>
    %313 = arith.negf %312 : vector<8x128xf32>
    %314 = math.exp %313 : vector<8x128xf32>
    %cst_51 = arith.constant 1.000000e+00 : f32
    %315 = vector.broadcast %cst_51 : f32 to vector<8x128xf32>
    %316 = arith.addf %315, %314 : vector<8x128xf32>
    %317 = arith.divf %315, %316 : vector<8x128xf32>
    %318 = vector.extract_strided_slice %311 {offsets = [0, 128], sizes = [8, 128], strides = [1, 1]} : vector<8x512xf32> to vector<8x128xf32>
    %319 = arith.negf %318 : vector<8x128xf32>
    %320 = math.exp %319 : vector<8x128xf32>
    %cst_52 = arith.constant 1.000000e+00 : f32
    %321 = vector.broadcast %cst_52 : f32 to vector<8x128xf32>
    %322 = arith.addf %321, %320 : vector<8x128xf32>
    %323 = arith.divf %321, %322 : vector<8x128xf32>
    %324 = vector.extract_strided_slice %311 {offsets = [0, 256], sizes = [8, 128], strides = [1, 1]} : vector<8x512xf32> to vector<8x128xf32>
    %325 = math.tanh %324 : vector<8x128xf32>
    %326 = vector.extract_strided_slice %311 {offsets = [0, 384], sizes = [8, 128], strides = [1, 1]} : vector<8x512xf32> to vector<8x128xf32>
    %327 = arith.negf %326 : vector<8x128xf32>
    %328 = math.exp %327 : vector<8x128xf32>
    %cst_53 = arith.constant 1.000000e+00 : f32
    %329 = vector.broadcast %cst_53 : f32 to vector<8x128xf32>
    %330 = arith.addf %329, %328 : vector<8x128xf32>
    %331 = arith.divf %329, %330 : vector<8x128xf32>
    %332 = arith.mulf %323, %300 : vector<8x128xf32>
    %333 = arith.mulf %317, %325 : vector<8x128xf32>
    %334 = arith.addf %332, %333 : vector<8x128xf32>
    %335 = math.tanh %334 : vector<8x128xf32>
    %336 = arith.mulf %331, %335 : vector<8x128xf32>
    %c7_i32 = arith.constant 7 : i32
    %337 = arith.addi %5, %c7_i32 : i32
    %338 = vector.broadcast %337 : i32 to vector<8x1xi32>
    %339 = arith.cmpi slt, %338, %3 : vector<8x1xi32>
    %340 = vector.shape_cast %339 : vector<8x1xi1> to vector<8x1xi1>
    %341 = vector.broadcast %340 : vector<8x1xi1> to vector<8x128xi1>
    %342 = arith.select %341, %334, %300 : vector<8x128xi1>, vector<8x128xf32>
    %343 = vector.shape_cast %339 : vector<8x1xi1> to vector<8x1xi1>
    %344 = vector.broadcast %343 : vector<8x1xi1> to vector<8x128xi1>
    %345 = arith.select %344, %336, %303 : vector<8x128xi1>, vector<8x128xf32>
    %cst_54 = arith.constant 0.000000e+00 : f32
    %346 = vector.shape_cast %339 : vector<8x1xi1> to vector<8x1xi1>
    %347 = vector.broadcast %346 : vector<8x1xi1> to vector<8x128xi1>
    %348 = vector.broadcast %cst_54 : f32 to vector<8x128xf32>
    %349 = arith.select %347, %336, %348 : vector<8x128xi1>, vector<8x128xf32>
    %c0_55 = arith.constant 0 : index
    %c0_56 = arith.constant 0 : index
    %350 = vector.load %arg9[%c0_55, %c0_56] : memref<8x128xf32, #tpu.memory_space<vmem>>, vector<8x128xf32>
    tpu.vector_store %arg9[%c0_55, %c0_56], %345 {strides = array<i32>} : memref<8x128xf32, #tpu.memory_space<vmem>>, vector<8x128xf32>,
    %c0_57 = arith.constant 0 : index
    %c0_58 = arith.constant 0 : index
    %351 = vector.load %arg10[%c0_57, %c0_58] : memref<8x128xf32, #tpu.memory_space<vmem>>, vector<8x128xf32>
    tpu.vector_store %arg10[%c0_57, %c0_58], %342 {strides = array<i32>} : memref<8x128xf32, #tpu.memory_space<vmem>>, vector<8x128xf32>,
    %352 = tpu.concatenate %55, %97, %139, %181, %223, %265, %307, %349 in 0 : vector<8x128xf32>, vector<8x128xf32>, vector<8x128xf32>, vector<8x128xf32>, vector<8x128xf32>, vector<8x128xf32>, vector<8x128xf32>, vector<8x128xf32> -> vector<64x128xf32>
    %353 = arith.truncf %352 : vector<64x128xf32> to vector<64x128xbf16>
    %c0_59 = arith.constant 0 : index
    %c0_60 = arith.constant 0 : index
    %354 = vector.load %arg6[%c0_59, %c0_60] : memref<128x128xbf16, #tpu.memory_space<vmem>>, vector<128x128xbf16>
    %cst_61 = arith.constant dense<0.000000e+00> : vector<64x128xf32>
    %355 = tpu.matmul %353, %354, %cst_61 {dimension_numbers = #tpu.dot_dimension_numbers<[1], [0], [0], [1], [0, 0, 1, 1], [], []>} : vector<64x128xbf16>, vector<128x128xbf16>, vector<64x128xf32> -> vector<64x128xf32>
    %c0_62 = arith.constant 0 : index
    %c0_63 = arith.constant 0 : index
    %356 = vector.load %arg7[%c0_62, %c0_63] : memref<1x128xf32, #tpu.memory_space<vmem>>, vector<1x128xf32>
    %357 = vector.broadcast %356 : vector<1x128xf32> to vector<64x128xf32>
    %358 = arith.addf %355, %357 : vector<64x128xf32>
    %c0_64 = arith.constant 0 : index
    %c0_65 = arith.constant 0 : index
    %359 = vector.load %arg8[%c0_64, %c0_65] : memref<64x128xf32, #tpu.memory_space<vmem>>, vector<64x128xf32>
    tpu.vector_store %arg8[%c0_64, %c0_65], %358 {strides = array<i32>} : memref<64x128xf32, #tpu.memory_space<vmem>>, vector<64x128xf32>,
    return
  }
  func.func @transform_0(%arg0: i32) -> (i32, i32) {
    %c0_i32 = arith.constant 0 : i32
    %c0_i32_0 = arith.constant 0 : i32
    return %arg0, %c0_i32 : i32, i32
  }
  func.func @transform_1(%arg0: i32) -> (i32, i32) {
    %c0_i32 = arith.constant 0 : i32
    %c0_i32_0 = arith.constant 0 : i32
    %c0_i32_1 = arith.constant 0 : i32
    return %c0_i32, %c0_i32_0 : i32, i32
  }
  func.func @transform_2(%arg0: i32) -> (i32, i32) {
    %c0_i32 = arith.constant 0 : i32
    %c0_i32_0 = arith.constant 0 : i32
    %c0_i32_1 = arith.constant 0 : i32
    return %c0_i32, %c0_i32_0 : i32, i32
  }
  func.func @transform_3(%arg0: i32) -> (i32, i32) {
    %c0_i32 = arith.constant 0 : i32
    %c0_i32_0 = arith.constant 0 : i32
    %c0_i32_1 = arith.constant 0 : i32
    return %c0_i32, %c0_i32_0 : i32, i32
  }
  func.func @transform_4(%arg0: i32) -> (i32, i32) {
    %c0_i32 = arith.constant 0 : i32
    %c0_i32_0 = arith.constant 0 : i32
    %c0_i32_1 = arith.constant 0 : i32
    return %c0_i32, %c0_i32_0 : i32, i32
  }
  func.func @transform_5(%arg0: i32) -> (i32, i32) {
    %c0_i32 = arith.constant 0 : i32
    %c0_i32_0 = arith.constant 0 : i32
    %c0_i32_1 = arith.constant 0 : i32
    return %c0_i32, %c0_i32_0 : i32, i32
  }
  func.func @transform_6(%arg0: i32) -> (i32, i32) {
    %c0_i32 = arith.constant 0 : i32
    %c0_i32_0 = arith.constant 0 : i32
    %c0_i32_1 = arith.constant 0 : i32
    return %c0_i32, %c0_i32_0 : i32, i32
  }
  func.func @transform_7(%arg0: i32) -> (i32, i32) {
    %c0_i32 = arith.constant 0 : i32
    %c0_i32_0 = arith.constant 0 : i32
    return %arg0, %c0_i32 : i32, i32
  }
}

</mosaic_0001>

<llo_original>
// kernel: tpu_custom_call.1
$region0: #{tpu_custom_call.1}
  #allocation0 [shape = 'u32[]', space=smem, size = 0x4, offset = 0x4, fixed_abs, tag = 'smem constant byte address 0x4 - core index']
  #allocation1 [shape = 'u32[144,128]{1,0:T(1,128)}', space=vmem, size = 0x12000, scoped, tag = 'internal scratch']
  #allocation2 [shape = 'f32[8,128]{1,0:T(8,128)}', space=vmem, size = 0x1000, scoped, tag = 'scratch operand']
  #allocation3 [shape = 'f32[8,128]{1,0:T(8,128)}', space=vmem, size = 0x1000, scoped, tag = 'scratch operand']
  %s0 = inlined_call_operand.vmem [shape: bf16[64,32], index: 0, kind: input, shape index: {}]
  %s1 = inlined_call_operand.vmem [shape: s32[8,1], index: 1, kind: input, shape index: {}]
  %s2 = inlined_call_operand.vmem [shape: bf16[32,512], index: 2, kind: input, shape index: {}]
  %s3 = inlined_call_operand.hbm [shape: bf16[128,512], index: 3, kind: input, shape index: {}]
  %s4 = inlined_call_operand.vmem [shape: f32[1,512], index: 4, kind: input, shape index: {}]
  %s5 = inlined_call_operand.hbm [shape: bf16[128,128], index: 5, kind: input, shape index: {}]
  %s6 = inlined_call_operand.vmem [shape: f32[1,128], index: 6, kind: input, shape index: {}]
  %s7 = inlined_call_operand.hbm [shape: f32[64,128], index: 7, kind: output, shape index: {}]
  %s8 = sld [smem:[#allocation0]]
  $region50: #{tpu_custom_call.1} parent=0
    _
  %s10 = ssub.s32 1, %s8
  %s11 = scalar_select 0, %s10, %s8
  $region1: #{tpu_custom_call.1} parent=0
    #allocation4 [shape = 'u8[131072]{0}', space=vmem, size = 0x20000, scoped, tag = 'input window, operand 3, single buffered']
    #allocation5 [shape = 's32[1]{0}', space=sflag, size = 0x4, scoped, tag = 'scoped memory for tpu_custom_call.1']
    #allocation6 [shape = 's32[1]{0}', space=sflag, size = 0x4, scoped, tag = 'scoped memory for tpu_custom_call.1']
    #allocation7 [shape = 'u8[32768]{0}', space=vmem, size = 0x8000, scoped, tag = 'input window, operand 5, single buffered']
    #allocation8 [shape = 's32[1]{0}', space=sflag, size = 0x4, scoped, tag = 'scoped memory for tpu_custom_call.1']
    #allocation9 [shape = 'u8[32768]{0}', space=vmem, size = 0x8000, scoped, tag = 'output window, operand 0, single buffered']
    %12 = vsyncpa [#allocation5], 0
    %13 = vsyncpa [#allocation8], 0
    %14 = vsyncpa [#allocation6], 0
    // Predicated region
    $region2: #{tpu_custom_call.1} parent=1 // pred_check
      _
    $region3: #{tpu_custom_call.1} parent=1 // pred_check_branch
      %16 = sbr.rel (0) target = $region5
    $region4: #{tpu_custom_call.1} parent=1 // pred_region
      _
    $region5: #{tpu_custom_call.1} parent=1 // pred_fallthru
      _
    // Predicated region
    $region6: #{tpu_custom_call.1} parent=1 // pred_check
      _
    $region7: #{tpu_custom_call.1} parent=1 // pred_check_branch
      %18 = sbr.rel (0) target = $region9
    $region8: #{tpu_custom_call.1} parent=1 // pred_region
      _
    $region9: #{tpu_custom_call.1} parent=1 // pred_fallthru
      _
    // Predicated region
    $region10: #{tpu_custom_call.1} parent=1 // pred_check
      _
    $region11: #{tpu_custom_call.1} parent=1 // pred_check_branch
      %20 = sbr.rel (0) target = $region13
    $region12: #{tpu_custom_call.1} parent=1 // pred_region
      _
    $region13: #{tpu_custom_call.1} parent=1 // pred_fallthru
      _
    // Predicated region
    $region14: #{tpu_custom_call.1} parent=1 // pred_check
      _
    $region15: #{tpu_custom_call.1} parent=1 // pred_check_branch
      %22 = sbr.rel (0) target = $region17
    $region16: #{tpu_custom_call.1} parent=1 // pred_region
      %s24 = ssub.s32 4096, 4096
      %25 = vsyncadd [#allocation5], %s24
      %s26 = sshll.u32 [#allocation4], 4
      %s27 = int_to_ptr.vmem [resolvable:$true] %s26
      %32 = dma.hbm_to_vmem [thread:$0]  %s3, 4096, %s27, [#allocation5], 256, 256, 16
    $region17: #{tpu_custom_call.1} parent=1 // pred_fallthru
      _
    // Predicated region
    $region18: #{tpu_custom_call.1} parent=1 // pred_check
      _
    $region19: #{tpu_custom_call.1} parent=1 // pred_check_branch
      %34 = sbr.rel (0) target = $region21
    $region20: #{tpu_custom_call.1} parent=1 // pred_region
      _
    $region21: #{tpu_custom_call.1} parent=1 // pred_fallthru
      _
    // Predicated region
    $region22: #{tpu_custom_call.1} parent=1 // pred_check
      _
    $region23: #{tpu_custom_call.1} parent=1 // pred_check_branch
      %36 = sbr.rel (0) target = $region25
    $region24: #{tpu_custom_call.1} parent=1 // pred_region
      %s38 = ssub.s32 1024, 1024
      %39 = vsyncadd [#allocation8], %s38
      %s40 = sshll.u32 [#allocation7], 4
      %s41 = int_to_ptr.vmem [resolvable:$true] %s40
      %46 = dma.hbm_to_vmem [thread:$0]  %s5, 1024, %s41, [#allocation8], 64, 64, 4
    $region25: #{tpu_custom_call.1} parent=1 // pred_fallthru
      _
    // Predicated region
    $region26: #{tpu_custom_call.1} parent=1 // pred_check
      _
    $region27: #{tpu_custom_call.1} parent=1 // pred_check_branch
      %48 = sbr.rel (0) target = $region29
    $region28: #{tpu_custom_call.1} parent=1 // pred_region
      _
    $region29: #{tpu_custom_call.1} parent=1 // pred_fallthru
      _
    // Predicated region
    $region30: #{tpu_custom_call.1} parent=1 // pred_check
      _
    $region31: #{tpu_custom_call.1} parent=1 // pred_check_branch
      %50 = sbr.rel (0) target = $region33
    $region32: #{tpu_custom_call.1} parent=1 // pred_region
      %51 = dma.done [#allocation5], 4096
    $region33: #{tpu_custom_call.1} parent=1 // pred_fallthru
      _
    // Predicated region
    $region34: #{tpu_custom_call.1} parent=1 // pred_check
      _
    $region35: #{tpu_custom_call.1} parent=1 // pred_check_branch
      %53 = sbr.rel (0) target = $region37
    $region36: #{tpu_custom_call.1} parent=1 // pred_region
      %54 = dma.done [#allocation8], 1024
    $region37: #{tpu_custom_call.1} parent=1 // pred_fallthru
      _
    %p56 = scmp.eq.s32.totalorder 0, 0
    // Predicated region
    $region38: #{tpu_custom_call.1} parent=1 // pred_check
      %p57 = pneg %p56
    $region39: #{tpu_custom_call.1} parent=1 // pred_check_branch
      %59 = sbr.rel (%p57) target = $region41
    $region40: #{tpu_custom_call.1} parent=1 // pred_region
      %60 = vst [vmem:[#allocation2] sm:$0xff] 0.0
      %61 = vst [vmem:[#allocation3] sm:$0xff] 0.0
    $region41: #{tpu_custom_call.1} parent=1 // pred_fallthru
      _
    %v62 = vld [vmem:[%s1] sm:$0xff]
    %v63 = vld [vmem:[#allocation4] sm:$0xff]
    %v64 = vld [vmem:[#allocation4 + $0x8] sm:$0xff]
    %v65 = vld [vmem:[#allocation4 + $0x10] sm:$0xff]
    %v66 = vld [vmem:[#allocation4 + $0x18] sm:$0xff]
    %v67 = vld [vmem:[#allocation4 + $0x20] sm:$0xff]
    %v68 = vld [vmem:[#allocation4 + $0x28] sm:$0xff]
    %v69 = vld [vmem:[#allocation4 + $0x30] sm:$0xff]
    %v70 = vld [vmem:[#allocation4 + $0x38] sm:$0xff]
    %v71 = vld [vmem:[#allocation4 + $0x40] sm:$0xff]
    %v72 = vld [vmem:[#allocation4 + $0x48] sm:$0xff]
    %v73 = vld [vmem:[#allocation4 + $0x50] sm:$0xff]
    %v74 = vld [vmem:[#allocation4 + $0x58] sm:$0xff]
    %v75 = vld [vmem:[#allocation4 + $0x60] sm:$0xff]
    %v76 = vld [vmem:[#allocation4 + $0x68] sm:$0xff]
    %v77 = vld [vmem:[#allocation4 + $0x70] sm:$0xff]
    %v78 = vld [vmem:[#allocation4 + $0x78] sm:$0xff]
    %v79 = vld [vmem:[#allocation4 + $0x80] sm:$0xff]
    %v80 = vld [vmem:[#allocation4 + $0x88] sm:$0xff]
    %v81 = vld [vmem:[#allocation4 + $0x90] sm:$0xff]
    %v82 = vld [vmem:[#allocation4 + $0x98] sm:$0xff]
    %v83 = vld [vmem:[#allocation4 + $0xa0] sm:$0xff]
    %v84 = vld [vmem:[#allocation4 + $0xa8] sm:$0xff]
    %v85 = vld [vmem:[#allocation4 + $0xb0] sm:$0xff]
    %v86 = vld [vmem:[#allocation4 + $0xb8] sm:$0xff]
    %v87 = vld [vmem:[#allocation4 + $0xc0] sm:$0xff]
    %v88 = vld [vmem:[#allocation4 + $0xc8] sm:$0xff]
    %v89 = vld [vmem:[#allocation4 + $0xd0] sm:$0xff]
    %v90 = vld [vmem:[#allocation4 + $0xd8] sm:$0xff]
    %v91 = vld [vmem:[#allocation4 + $0xe0] sm:$0xff]
    %v92 = vld [vmem:[#allocation4 + $0xe8] sm:$0xff]
    %v93 = vld [vmem:[#allocation4 + $0xf0] sm:$0xff]
    %v94 = vld [vmem:[#allocation4 + $0xf8] sm:$0xff]
    %s95 = smul.u32 0, 8
    %v96 = vld [vmem:[%s0] sm:$0xf]
    %v97 = vld [vmem:[%s0 + $0x4] sm:$0xf]
    %v98 = vld [vmem:[%s0 + $0x8] sm:$0xf]
    %v99 = vld [vmem:[%s0 + $0xc] sm:$0xf]
    %v100 = vld [vmem:[%s0 + $0x10] sm:$0xf]
    %v101 = vld [vmem:[%s0 + $0x14] sm:$0xf]
    %v102 = vld [vmem:[%s0 + $0x18] sm:$0xf]
    %v103 = vld [vmem:[%s0 + $0x1c] sm:$0xf]
    %v104 = vld [vmem:[%s2] sm:$0xff]
    %v105 = vld [vmem:[%s2 + $0x8] sm:$0xff]
    %v106 = vld [vmem:[%s2 + $0x10] sm:$0xff]
    %v107 = vld [vmem:[%s2 + $0x18] sm:$0xff]
    %v108 = vld [vmem:[%s2 + $0x20] sm:$0xff]
    %v109 = vld [vmem:[%s2 + $0x28] sm:$0xff]
    %v110 = vld [vmem:[%s2 + $0x30] sm:$0xff]
    %v111 = vld [vmem:[%s2 + $0x38] sm:$0xff]
    %v112 = vld [vmem:[%s4] sm:$0xf]
    %v114 = vlaneseq
    %v115 = vshrl.u32 %v114, 7
    %v116 = vsub.s32 0, %v115
    %v117 = vrot.slane %v112, %v116
    %v118 = vlaneseq
    %v119 = vshrl.u32 %v118, 7
    %v120 = vsub.s32 1, %v119
    %v121 = vrot.slane %v112, %v120
    %v122 = vlaneseq
    %v123 = vshrl.u32 %v122, 7
    %v124 = vsub.s32 2, %v123
    %v125 = vrot.slane %v112, %v124
    %v126 = vlaneseq
    %v127 = vshrl.u32 %v126, 7
    %v128 = vsub.s32 3, %v127
    %v129 = vrot.slane %v112, %v128
    %v142 = vunpack.c.l.b16 %v96
    %v143 = vunpack.c.l.b16 %v97
    %v144 = vunpack.c.l.b16 %v98
    %v145 = vunpack.c.l.b16 %v99
    %v146 = vunpack.c.l.b16 %v100
    %v147 = vunpack.c.l.b16 %v101
    %v148 = vunpack.c.l.b16 %v102
    %v149 = vunpack.c.l.b16 %v103
    %v150 = vpack.c.b16 %v143, %v142
    %v151 = vpack.c.b16 %v145, %v144
    %v152 = vpack.c.b16 %v147, %v146
    %v153 = vpack.c.b16 %v149, %v148
    %v162 = vunpack.c.l.b16 %v104
    %v163 = vunpack.c.h.b16 %v104
    %v164 = vunpack.c.l.b16 %v105
    %v165 = vunpack.c.h.b16 %v105
    %v166 = vunpack.c.l.b16 %v106
    %v167 = vunpack.c.h.b16 %v106
    %v168 = vunpack.c.l.b16 %v107
    %v169 = vunpack.c.h.b16 %v107
    %v170 = vunpack.c.l.b16 %v108
    %v171 = vunpack.c.h.b16 %v108
    %v172 = vunpack.c.l.b16 %v109
    %v173 = vunpack.c.h.b16 %v109
    %v174 = vunpack.c.l.b16 %v110
    %v175 = vunpack.c.h.b16 %v110
    %v176 = vunpack.c.l.b16 %v111
    %v177 = vunpack.c.h.b16 %v111
    %v178 = vpack.c.b16 %v166, %v162
    %v179 = vpack.c.b16 %v167, %v163
    %v180 = vpack.c.b16 %v168, %v164
    %v181 = vpack.c.b16 %v169, %v165
    %v182 = vpack.c.b16 %v174, %v170
    %v183 = vpack.c.b16 %v175, %v171
    %v184 = vpack.c.b16 %v176, %v172
    %v185 = vpack.c.b16 %v177, %v173
    %vm194 = vcmask 261120
    %v196 = vsel %vm194, %v150, 0
    %v199 = vsel %vm194, %v151, 0
    %v202 = vsel %vm194, %v152, 0
    %v205 = vsel %vm194, %v153, 0
    %207 = vmatprep.subr.bf16.mxu0 %v179
    %208 = vmatpush1.bf16.msra.mxu0 %v178
    %209 = vmatprep.subr.bf16.mxu0 %v183
    %210 = vmatpush1.bf16.msra.mxu0 %v182
    %211 = vmatprep.subr.bf16.mxu0 0
    %212 = vmatpush1.bf16.msra.mxu0 0
    %213 = vmatprep.subr.bf16.mxu0 0
    %214 = vmatpush1.bf16.msra.mxu0 0
    %215 = vmatprep.subr.bf16.mxu0 0
    %216 = vmatpush1.bf16.msra.mxu0 0
    %217 = vmatprep.subr.bf16.mxu0 0
    %218 = vmatpush1.bf16.msra.mxu0 0
    %219 = vmatprep.subr.bf16.mxu0 0
    %220 = vmatpush1.bf16.msra.mxu0 0
    %221 = vmatprep.subr.bf16.mxu0 0
    %222 = vmatpush1.bf16.msra.mxu0 0
    %223 = vmatprep.subr.bf16.mxu0 0
    %224 = vmatpush1.bf16.msra.mxu0 0
    %225 = vmatprep.subr.bf16.mxu0 0
    %226 = vmatpush1.bf16.msra.mxu0 0
    %227 = vmatprep.subr.bf16.mxu0 0
    %228 = vmatpush1.bf16.msra.mxu0 0
    %229 = vmatprep.subr.bf16.mxu0 0
    %230 = vmatpush1.bf16.msra.mxu0 0
    %231 = vmatprep.subr.bf16.mxu0 0
    %232 = vmatpush1.bf16.msra.mxu0 0
    %233 = vmatprep.subr.bf16.mxu0 0
    %234 = vmatpush1.bf16.msra.mxu0 0
    %235 = vmatprep.subr.bf16.mxu0 0
    %236 = vmatpush1.bf16.msra.mxu0 0
    %237 = vmatprep.subr.bf16.mxu0 0
    %238 = vmatpush1.bf16.msra.mxu0 0
    %239 = vmatprep.mubr.bf16.mxu0 0
    %240 = vmatmul.mubr.bf16.gmra.mrb[0].mxu0 %v196
    %v241 = vpop.f32.mrb[0].mxu0
    %v242 = vadd.f32 %v117, %v241
    %v243 = vpop.f32.mrb[0].mxu0
    %v244 = vadd.f32 %v121, %v243
    %v245 = vpop.f32.mrb[0].mxu0
    %v246 = vadd.f32 %v117, %v245
    %v247 = vpop.f32.mrb[0].mxu0
    %v248 = vadd.f32 %v121, %v247
    %249 = vmatprep.mubr.bf16.mxu0 0
    %250 = vmatmul.mubr.bf16.gmra.mrb[0].mxu0 %v199
    %v251 = vpop.f32.mrb[0].mxu0
    %v252 = vadd.f32 %v117, %v251
    %v253 = vpop.f32.mrb[0].mxu0
    %v254 = vadd.f32 %v121, %v253
    %v255 = vpop.f32.mrb[0].mxu0
    %v256 = vadd.f32 %v117, %v255
    %v257 = vpop.f32.mrb[0].mxu0
    %v258 = vadd.f32 %v121, %v257
    %259 = vmatprep.mubr.bf16.mxu0 0
    %260 = vmatmul.mubr.bf16.gmra.mrb[0].mxu0 %v202
    %v261 = vpop.f32.mrb[0].mxu0
    %v262 = vadd.f32 %v117, %v261
    %v263 = vpop.f32.mrb[0].mxu0
    %v264 = vadd.f32 %v121, %v263
    %v265 = vpop.f32.mrb[0].mxu0
    %v266 = vadd.f32 %v117, %v265
    %v267 = vpop.f32.mrb[0].mxu0
    %v268 = vadd.f32 %v121, %v267
    %269 = vmatprep.mubr.bf16.mxu0 0
    %270 = vmatmul.mubr.bf16.gmra.mrb[0].mxu0 %v205
    %v271 = vpop.f32.mrb[0].mxu0
    %v272 = vadd.f32 %v117, %v271
    %v273 = vpop.f32.mrb[0].mxu0
    %v274 = vadd.f32 %v121, %v273
    %v275 = vpop.f32.mrb[0].mxu0
    %v276 = vadd.f32 %v117, %v275
    %v277 = vpop.f32.mrb[0].mxu0
    %v278 = vadd.f32 %v121, %v277
    %279 = vdwg.mxu0
    %280 = vmatprep.subr.bf16.mxu0 %v181
    %281 = vmatpush1.bf16.msra.mxu0 %v180
    %282 = vmatprep.subr.bf16.mxu0 %v185
    %283 = vmatpush1.bf16.msra.mxu0 %v184
    %284 = vmatprep.subr.bf16.mxu0 0
    %285 = vmatpush1.bf16.msra.mxu0 0
    %286 = vmatprep.subr.bf16.mxu0 0
    %287 = vmatpush1.bf16.msra.mxu0 0
    %288 = vmatprep.subr.bf16.mxu0 0
    %289 = vmatpush1.bf16.msra.mxu0 0
    %290 = vmatprep.subr.bf16.mxu0 0
    %291 = vmatpush1.bf16.msra.mxu0 0
    %292 = vmatprep.subr.bf16.mxu0 0
    %293 = vmatpush1.bf16.msra.mxu0 0
    %294 = vmatprep.subr.bf16.mxu0 0
    %295 = vmatpush1.bf16.msra.mxu0 0
    %296 = vmatprep.subr.bf16.mxu0 0
    %297 = vmatpush1.bf16.msra.mxu0 0
    %298 = vmatprep.subr.bf16.mxu0 0
    %299 = vmatpush1.bf16.msra.mxu0 0
    %300 = vmatprep.subr.bf16.mxu0 0
    %301 = vmatpush1.bf16.msra.mxu0 0
    %302 = vmatprep.subr.bf16.mxu0 0
    %303 = vmatpush1.bf16.msra.mxu0 0
    %304 = vmatprep.subr.bf16.mxu0 0
    %305 = vmatpush1.bf16.msra.mxu0 0
    %306 = vmatprep.subr.bf16.mxu0 0
    %307 = vmatpush1.bf16.msra.mxu0 0
    %308 = vmatprep.subr.bf16.mxu0 0
    %309 = vmatpush1.bf16.msra.mxu0 0
    %310 = vmatprep.subr.bf16.mxu0 0
    %311 = vmatpush1.bf16.msra.mxu0 0
    %312 = vmatprep.mubr.bf16.mxu0 0
    %313 = vmatmul.mubr.bf16.gmra.mrb[0].mxu0 %v196
    %v314 = vpop.f32.mrb[0].mxu0
    %v315 = vadd.f32 %v125, %v314
    %v316 = vpop.f32.mrb[0].mxu0
    %v317 = vadd.f32 %v129, %v316
    %v318 = vpop.f32.mrb[0].mxu0
    %v319 = vadd.f32 %v125, %v318
    %v320 = vpop.f32.mrb[0].mxu0
    %v321 = vadd.f32 %v129, %v320
    %322 = vmatprep.mubr.bf16.mxu0 0
    %323 = vmatmul.mubr.bf16.gmra.mrb[0].mxu0 %v199
    %v324 = vpop.f32.mrb[0].mxu0
    %v325 = vadd.f32 %v125, %v324
    %v326 = vpop.f32.mrb[0].mxu0
    %v327 = vadd.f32 %v129, %v326
    %v328 = vpop.f32.mrb[0].mxu0
    %v329 = vadd.f32 %v125, %v328
    %v330 = vpop.f32.mrb[0].mxu0
    %v331 = vadd.f32 %v129, %v330
    %332 = vmatprep.mubr.bf16.mxu0 0
    %333 = vmatmul.mubr.bf16.gmra.mrb[0].mxu0 %v202
    %v334 = vpop.f32.mrb[0].mxu0
    %v335 = vadd.f32 %v125, %v334
    %v336 = vpop.f32.mrb[0].mxu0
    %v337 = vadd.f32 %v129, %v336
    %v338 = vpop.f32.mrb[0].mxu0
    %v339 = vadd.f32 %v125, %v338
    %v340 = vpop.f32.mrb[0].mxu0
    %v341 = vadd.f32 %v129, %v340
    %342 = vmatprep.mubr.bf16.mxu0 0
    %343 = vmatmul.mubr.bf16.gmra.mrb[0].mxu0 %v205
    %v344 = vpop.f32.mrb[0].mxu0
    %v345 = vadd.f32 %v125, %v344
    %v346 = vpop.f32.mrb[0].mxu0
    %v347 = vadd.f32 %v129, %v346
    %v348 = vpop.f32.mrb[0].mxu0
    %v349 = vadd.f32 %v125, %v348
    %v350 = vpop.f32.mrb[0].mxu0
    %v351 = vadd.f32 %v129, %v350
    %352 = vdwg.mxu0
    %v353 = vld [vmem:[#allocation2] sm:$0xff]
    %v354 = vld [vmem:[#allocation3] sm:$0xff]
    %v355 = vpack.c.bf16 %v353, %v353
    %v388 = vunpack.c.l.b16 %v63
    %v389 = vunpack.c.h.b16 %v63
    %v390 = vunpack.c.l.b16 %v64
    %v391 = vunpack.c.h.b16 %v64
    %v392 = vunpack.c.l.b16 %v65
    %v393 = vunpack.c.h.b16 %v65
    %v394 = vunpack.c.l.b16 %v66
    %v395 = vunpack.c.h.b16 %v66
    %v396 = vunpack.c.l.b16 %v67
    %v397 = vunpack.c.h.b16 %v67
    %v398 = vunpack.c.l.b16 %v68
    %v399 = vunpack.c.h.b16 %v68
    %v400 = vunpack.c.l.b16 %v69
    %v401 = vunpack.c.h.b16 %v69
    %v402 = vunpack.c.l.b16 %v70
    %v403 = vunpack.c.h.b16 %v70
    %v404 = vunpack.c.l.b16 %v71
    %v405 = vunpack.c.h.b16 %v71
    %v406 = vunpack.c.l.b16 %v72
    %v407 = vunpack.c.h.b16 %v72
    %v408 = vunpack.c.l.b16 %v73
    %v409 = vunpack.c.h.b16 %v73
    %v410 = vunpack.c.l.b16 %v74
    %v411 = vunpack.c.h.b16 %v74
    %v412 = vunpack.c.l.b16 %v75
    %v413 = vunpack.c.h.b16 %v75
    %v414 = vunpack.c.l.b16 %v76
    %v415 = vunpack.c.h.b16 %v76
    %v416 = vunpack.c.l.b16 %v77
    %v417 = vunpack.c.h.b16 %v77
    %v418 = vunpack.c.l.b16 %v78
    %v419 = vunpack.c.h.b16 %v78
    %v420 = vunpack.c.l.b16 %v79
    %v421 = vunpack.c.h.b16 %v79
    %v422 = vunpack.c.l.b16 %v80
    %v423 = vunpack.c.h.b16 %v80
    %v424 = vunpack.c.l.b16 %v81
    %v425 = vunpack.c.h.b16 %v81
    %v426 = vunpack.c.l.b16 %v82
    %v427 = vunpack.c.h.b16 %v82
    %v428 = vunpack.c.l.b16 %v83
    %v429 = vunpack.c.h.b16 %v83
    %v430 = vunpack.c.l.b16 %v84
    %v431 = vunpack.c.h.b16 %v84
    %v432 = vunpack.c.l.b16 %v85
    %v433 = vunpack.c.h.b16 %v85
    %v434 = vunpack.c.l.b16 %v86
    %v435 = vunpack.c.h.b16 %v86
    %v436 = vunpack.c.l.b16 %v87
    %v437 = vunpack.c.h.b16 %v87
    %v438 = vunpack.c.l.b16 %v88
    %v439 = vunpack.c.h.b16 %v88
    %v440 = vunpack.c.l.b16 %v89
    %v441 = vunpack.c.h.b16 %v89
    %v442 = vunpack.c.l.b16 %v90
    %v443 = vunpack.c.h.b16 %v90
    %v444 = vunpack.c.l.b16 %v91
    %v445 = vunpack.c.h.b16 %v91
    %v446 = vunpack.c.l.b16 %v92
    %v447 = vunpack.c.h.b16 %v92
    %v448 = vunpack.c.l.b16 %v93
    %v449 = vunpack.c.h.b16 %v93
    %v450 = vunpack.c.l.b16 %v94
    %v451 = vunpack.c.h.b16 %v94
    %v452 = vpack.c.b16 %v392, %v388
    %v453 = vpack.c.b16 %v393, %v389
    %v454 = vpack.c.b16 %v394, %v390
    %v455 = vpack.c.b16 %v395, %v391
    %v456 = vpack.c.b16 %v400, %v396
    %v457 = vpack.c.b16 %v401, %v397
    %v458 = vpack.c.b16 %v402, %v398
    %v459 = vpack.c.b16 %v403, %v399
    %v460 = vpack.c.b16 %v408, %v404
    %v461 = vpack.c.b16 %v409, %v405
    %v462 = vpack.c.b16 %v410, %v406
    %v463 = vpack.c.b16 %v411, %v407
    %v464 = vpack.c.b16 %v416, %v412
    %v465 = vpack.c.b16 %v417, %v413
    %v466 = vpack.c.b16 %v418, %v414
    %v467 = vpack.c.b16 %v419, %v415
    %v468 = vpack.c.b16 %v424, %v420
    %v469 = vpack.c.b16 %v425, %v421
    %v470 = vpack.c.b16 %v426, %v422
    %v471 = vpack.c.b16 %v427, %v423
    %v472 = vpack.c.b16 %v432, %v428
    %v473 = vpack.c.b16 %v433, %v429
    %v474 = vpack.c.b16 %v434, %v430
    %v475 = vpack.c.b16 %v435, %v431
    %v476 = vpack.c.b16 %v440, %v436
    %v477 = vpack.c.b16 %v441, %v437
    %v478 = vpack.c.b16 %v442, %v438
    %v479 = vpack.c.b16 %v443, %v439
    %v480 = vpack.c.b16 %v448, %v444
    %v481 = vpack.c.b16 %v449, %v445
    %v482 = vpack.c.b16 %v450, %v446
    %v483 = vpack.c.b16 %v451, %v447
    %516 = vmatprep.subr.bf16.mxu0 %v453
    %517 = vmatpush1.bf16.msra.mxu0 %v452
    %518 = vmatprep.subr.bf16.mxu0 %v457
    %519 = vmatpush1.bf16.msra.mxu0 %v456
    %520 = vmatprep.subr.bf16.mxu0 %v461
    %521 = vmatpush1.bf16.msra.mxu0 %v460
    %522 = vmatprep.subr.bf16.mxu0 %v465
    %523 = vmatpush1.bf16.msra.mxu0 %v464
    %524 = vmatprep.subr.bf16.mxu0 %v469
    %525 = vmatpush1.bf16.msra.mxu0 %v468
    %526 = vmatprep.subr.bf16.mxu0 %v473
    %527 = vmatpush1.bf16.msra.mxu0 %v472
    %528 = vmatprep.subr.bf16.mxu0 %v477
    %529 = vmatpush1.bf16.msra.mxu0 %v476
    %530 = vmatprep.subr.bf16.mxu0 %v481
    %531 = vmatpush1.bf16.msra.mxu0 %v480
    %532 = vmatprep.subr.bf16.mxu0 0
    %533 = vmatpush1.bf16.msra.mxu0 0
    %534 = vmatprep.subr.bf16.mxu0 0
    %535 = vmatpush1.bf16.msra.mxu0 0
    %536 = vmatprep.subr.bf16.mxu0 0
    %537 = vmatpush1.bf16.msra.mxu0 0
    %538 = vmatprep.subr.bf16.mxu0 0
    %539 = vmatpush1.bf16.msra.mxu0 0
    %540 = vmatprep.subr.bf16.mxu0 0
    %541 = vmatpush1.bf16.msra.mxu0 0
    %542 = vmatprep.subr.bf16.mxu0 0
    %543 = vmatpush1.bf16.msra.mxu0 0
    %544 = vmatprep.subr.bf16.mxu0 0
    %545 = vmatpush1.bf16.msra.mxu0 0
    %546 = vmatprep.subr.bf16.mxu0 0
    %547 = vmatpush1.bf16.msra.mxu0 0
    %548 = vmatprep.mubr.bf16.mxu0 0
    %549 = vmatmul.mubr.bf16.gmra.mrb[0].mxu0 %v355
    %v550 = vpop.f32.mrb[0].mxu0
    %v551 = vadd.f32 0.0, %v550
    %v552 = vpop.f32.mrb[0].mxu0
    %v553 = vadd.f32 0.0, %v552
    %v554 = vpop.f32.mrb[0].mxu0
    %v555 = vpop.f32.mrb[0].mxu0
    %556 = vdwg.mxu0
    %557 = vmatprep.subr.bf16.mxu0 %v455
    %558 = vmatpush1.bf16.msra.mxu0 %v454
    %559 = vmatprep.subr.bf16.mxu0 %v459
    %560 = vmatpush1.bf16.msra.mxu0 %v458
    %561 = vmatprep.subr.bf16.mxu0 %v463
    %562 = vmatpush1.bf16.msra.mxu0 %v462
    %563 = vmatprep.subr.bf16.mxu0 %v467
    %564 = vmatpush1.bf16.msra.mxu0 %v466
    %565 = vmatprep.subr.bf16.mxu0 %v471
    %566 = vmatpush1.bf16.msra.mxu0 %v470
    %567 = vmatprep.subr.bf16.mxu0 %v475
    %568 = vmatpush1.bf16.msra.mxu0 %v474
    %569 = vmatprep.subr.bf16.mxu0 %v479
    %570 = vmatpush1.bf16.msra.mxu0 %v478
    %571 = vmatprep.subr.bf16.mxu0 %v483
    %572 = vmatpush1.bf16.msra.mxu0 %v482
    %573 = vmatprep.subr.bf16.mxu0 0
    %574 = vmatpush1.bf16.msra.mxu0 0
    %575 = vmatprep.subr.bf16.mxu0 0
    %576 = vmatpush1.bf16.msra.mxu0 0
    %577 = vmatprep.subr.bf16.mxu0 0
    %578 = vmatpush1.bf16.msra.mxu0 0
    %579 = vmatprep.subr.bf16.mxu0 0
    %580 = vmatpush1.bf16.msra.mxu0 0
    %581 = vmatprep.subr.bf16.mxu0 0
    %582 = vmatpush1.bf16.msra.mxu0 0
    %583 = vmatprep.subr.bf16.mxu0 0
    %584 = vmatpush1.bf16.msra.mxu0 0
    %585 = vmatprep.subr.bf16.mxu0 0
    %586 = vmatpush1.bf16.msra.mxu0 0
    %587 = vmatprep.subr.bf16.mxu0 0
    %588 = vmatpush1.bf16.msra.mxu0 0
    %589 = vmatprep.mubr.bf16.mxu0 0
    %590 = vmatmul.mubr.bf16.gmra.mrb[0].mxu0 %v355
    %v591 = vpop.f32.mrb[0].mxu0
    %v592 = vadd.f32 0.0, %v591
    %v593 = vpop.f32.mrb[0].mxu0
    %v594 = vadd.f32 0.0, %v593
    %v595 = vpop.f32.mrb[0].mxu0
    %v596 = vpop.f32.mrb[0].mxu0
    %597 = vdwg.mxu0
    %v598 = vadd.f32 %v242, %v551
    %v599 = vadd.f32 %v244, %v553
    %v600 = vadd.f32 %v315, %v592
    %v601 = vadd.f32 %v317, %v594
    %v602 = vxor.u32 %v598, 2147483648
    %v603 = vmul.f32 %v602, 1.442695
    %v604 = vpow.pop %v603
    %v605 = vadd.f32 %v604, 1.0
    %v606 = vrcp.pop %v605
    %v607 = vmul.f32 1.0, %v606
    %v608 = vxor.u32 %v599, 2147483648
    %v609 = vmul.f32 %v608, 1.442695
    %v610 = vpow.pop %v609
    %v611 = vadd.f32 %v610, 1.0
    %v612 = vrcp.pop %v611
    %v613 = vmul.f32 1.0, %v612
    %v614 = vtanh.pop %v600
    %v615 = vxor.u32 %v601, 2147483648
    %v616 = vmul.f32 %v615, 1.442695
    %v617 = vpow.pop %v616
    %v618 = vadd.f32 %v617, 1.0
    %v619 = vrcp.pop %v618
    %v620 = vmul.f32 1.0, %v619
    %v621 = vmul.f32 %v613, %v354
    %v622 = vmul.f32 %v607, %v614
    %v623 = vadd.f32 %v621, %v622
    %v624 = vtanh.pop %v623
    %v625 = vmul.f32 %v620, %v624
    %v626 = vstv %s95
    %vm627 = vcmp.lt.s32.totalorder %v626, %v62
    %v628 = vsel %vm627, 1, 0
    %629 = vset.pattern.permute.xlu0 0
    %630 = vperm.xlu0 %629, %v628
    %v631 = vpop.permute.xlu0 %630
    %vm632 = vcmp.eq.s32.totalorder %v631, 1
    %v633 = vsel %vm632, %v623, %v354
    %v634 = vsel %vm632, %v625, %v353
    %v635 = vsel %vm632, %v625, 0.0
    %v636 = vpack.c.bf16 %v634, %v634
    %637 = vmatprep.subr.bf16.mxu0 %v453
    %638 = vmatpush1.bf16.msra.mxu0 %v452
    %639 = vmatprep.subr.bf16.mxu0 %v457
    %640 = vmatpush1.bf16.msra.mxu0 %v456
    %641 = vmatprep.subr.bf16.mxu0 %v461
    %642 = vmatpush1.bf16.msra.mxu0 %v460
    %643 = vmatprep.subr.bf16.mxu0 %v465
    %644 = vmatpush1.bf16.msra.mxu0 %v464
    %645 = vmatprep.subr.bf16.mxu0 %v469
    %646 = vmatpush1.bf16.msra.mxu0 %v468
    %647 = vmatprep.subr.bf16.mxu0 %v473
    %648 = vmatpush1.bf16.msra.mxu0 %v472
    %649 = vmatprep.subr.bf16.mxu0 %v477
    %650 = vmatpush1.bf16.msra.mxu0 %v476
    %651 = vmatprep.subr.bf16.mxu0 %v481
    %652 = vmatpush1.bf16.msra.mxu0 %v480
    %653 = vmatprep.subr.bf16.mxu0 0
    %654 = vmatpush1.bf16.msra.mxu0 0
    %655 = vmatprep.subr.bf16.mxu0 0
    %656 = vmatpush1.bf16.msra.mxu0 0
    %657 = vmatprep.subr.bf16.mxu0 0
    %658 = vmatpush1.bf16.msra.mxu0 0
    %659 = vmatprep.subr.bf16.mxu0 0
    %660 = vmatpush1.bf16.msra.mxu0 0
    %661 = vmatprep.subr.bf16.mxu0 0
    %662 = vmatpush1.bf16.msra.mxu0 0
    %663 = vmatprep.subr.bf16.mxu0 0
    %664 = vmatpush1.bf16.msra.mxu0 0
    %665 = vmatprep.subr.bf16.mxu0 0
    %666 = vmatpush1.bf16.msra.mxu0 0
    %667 = vmatprep.subr.bf16.mxu0 0
    %668 = vmatpush1.bf16.msra.mxu0 0
    %669 = vmatprep.mubr.bf16.mxu0 0
    %670 = vmatmul.mubr.bf16.gmra.mrb[0].mxu0 %v636
    %v671 = vpop.f32.mrb[0].mxu0
    %v672 = vadd.f32 0.0, %v671
    %v673 = vpop.f32.mrb[0].mxu0
    %v674 = vadd.f32 0.0, %v673
    %v675 = vpop.f32.mrb[0].mxu0
    %v676 = vpop.f32.mrb[0].mxu0
    %677 = vdwg.mxu0
    %678 = vmatprep.subr.bf16.mxu0 %v455
    %679 = vmatpush1.bf16.msra.mxu0 %v454
    %680 = vmatprep.subr.bf16.mxu0 %v459
    %681 = vmatpush1.bf16.msra.mxu0 %v458
    %682 = vmatprep.subr.bf16.mxu0 %v463
    %683 = vmatpush1.bf16.msra.mxu0 %v462
    %684 = vmatprep.subr.bf16.mxu0 %v467
    %685 = vmatpush1.bf16.msra.mxu0 %v466
    %686 = vmatprep.subr.bf16.mxu0 %v471
    %687 = vmatpush1.bf16.msra.mxu0 %v470
    %688 = vmatprep.subr.bf16.mxu0 %v475
    %689 = vmatpush1.bf16.msra.mxu0 %v474
    %690 = vmatprep.subr.bf16.mxu0 %v479
    %691 = vmatpush1.bf16.msra.mxu0 %v478
    %692 = vmatprep.subr.bf16.mxu0 %v483
    %693 = vmatpush1.bf16.msra.mxu0 %v482
    %694 = vmatprep.subr.bf16.mxu0 0
    %695 = vmatpush1.bf16.msra.mxu0 0
    %696 = vmatprep.subr.bf16.mxu0 0
    %697 = vmatpush1.bf16.msra.mxu0 0
    %698 = vmatprep.subr.bf16.mxu0 0
    %699 = vmatpush1.bf16.msra.mxu0 0
    %700 = vmatprep.subr.bf16.mxu0 0
    %701 = vmatpush1.bf16.msra.mxu0 0
    %702 = vmatprep.subr.bf16.mxu0 0
    %703 = vmatpush1.bf16.msra.mxu0 0
    %704 = vmatprep.subr.bf16.mxu0 0
    %705 = vmatpush1.bf16.msra.mxu0 0
    %706 = vmatprep.subr.bf16.mxu0 0
    %707 = vmatpush1.bf16.msra.mxu0 0
    %708 = vmatprep.subr.bf16.mxu0 0
    %709 = vmatpush1.bf16.msra.mxu0 0
    %710 = vmatprep.mubr.bf16.mxu0 0
    %711 = vmatmul.mubr.bf16.gmra.mrb[0].mxu0 %v636
    %v712 = vpop.f32.mrb[0].mxu0
    %v713 = vadd.f32 0.0, %v712
    %v714 = vpop.f32.mrb[0].mxu0
    %v715 = vadd.f32 0.0, %v714
    %v716 = vpop.f32.mrb[0].mxu0
    %v717 = vpop.f32.mrb[0].mxu0
    %718 = vdwg.mxu0
    %v719 = vadd.f32 %v246, %v672
    %v720 = vadd.f32 %v248, %v674
    %v721 = vadd.f32 %v319, %v713
    %v722 = vadd.f32 %v321, %v715
    %v723 = vxor.u32 %v719, 2147483648
    %v724 = vmul.f32 %v723, 1.442695
    %v725 = vpow.pop %v724
    %v726 = vadd.f32 %v725, 1.0
    %v727 = vrcp.pop %v726
    %v728 = vmul.f32 1.0, %v727
    %v729 = vxor.u32 %v720, 2147483648
    %v730 = vmul.f32 %v729, 1.442695
    %v731 = vpow.pop %v730
    %v732 = vadd.f32 %v731, 1.0
    %v733 = vrcp.pop %v732
    %v734 = vmul.f32 1.0, %v733
    %v735 = vtanh.pop %v721
    %v736 = vxor.u32 %v722, 2147483648
    %v737 = vmul.f32 %v736, 1.442695
    %v738 = vpow.pop %v737
    %v739 = vadd.f32 %v738, 1.0
    %v740 = vrcp.pop %v739
    %v741 = vmul.f32 1.0, %v740
    %v742 = vmul.f32 %v734, %v633
    %v743 = vmul.f32 %v728, %v735
    %v744 = vadd.f32 %v742, %v743
    %v745 = vtanh.pop %v744
    %v746 = vmul.f32 %v741, %v745
    %s747 = sadd.s32 %s95, 1
    %v748 = vstv %s747
    %vm749 = vcmp.lt.s32.totalorder %v748, %v62
    %v750 = vsel %vm749, 1, 0
    %751 = vset.pattern.permute.xlu0 0
    %752 = vperm.xlu0 %751, %v750
    %v753 = vpop.permute.xlu0 %752
    %vm754 = vcmp.eq.s32.totalorder %v753, 1
    %v755 = vsel %vm754, %v744, %v633
    %v756 = vsel %vm754, %v746, %v634
    %v757 = vsel %vm754, %v746, 0.0
    %v758 = vpack.c.bf16 %v756, %v756
    %759 = vmatprep.subr.bf16.mxu0 %v453
    %760 = vmatpush1.bf16.msra.mxu0 %v452
    %761 = vmatprep.subr.bf16.mxu0 %v457
    %762 = vmatpush1.bf16.msra.mxu0 %v456
    %763 = vmatprep.subr.bf16.mxu0 %v461
    %764 = vmatpush1.bf16.msra.mxu0 %v460
    %765 = vmatprep.subr.bf16.mxu0 %v465
    %766 = vmatpush1.bf16.msra.mxu0 %v464
    %767 = vmatprep.subr.bf16.mxu0 %v469
    %768 = vmatpush1.bf16.msra.mxu0 %v468
    %769 = vmatprep.subr.bf16.mxu0 %v473
    %770 = vmatpush1.bf16.msra.mxu0 %v472
    %771 = vmatprep.subr.bf16.mxu0 %v477
    %772 = vmatpush1.bf16.msra.mxu0 %v476
    %773 = vmatprep.subr.bf16.mxu0 %v481
    %774 = vmatpush1.bf16.msra.mxu0 %v480
    %775 = vmatprep.subr.bf16.mxu0 0
    %776 = vmatpush1.bf16.msra.mxu0 0
    %777 = vmatprep.subr.bf16.mxu0 0
    %778 = vmatpush1.bf16.msra.mxu0 0
    %779 = vmatprep.subr.bf16.mxu0 0
    %780 = vmatpush1.bf16.msra.mxu0 0
    %781 = vmatprep.subr.bf16.mxu0 0
    %782 = vmatpush1.bf16.msra.mxu0 0
    %783 = vmatprep.subr.bf16.mxu0 0
    %784 = vmatpush1.bf16.msra.mxu0 0
    %785 = vmatprep.subr.bf16.mxu0 0
    %786 = vmatpush1.bf16.msra.mxu0 0
    %787 = vmatprep.subr.bf16.mxu0 0
    %788 = vmatpush1.bf16.msra.mxu0 0
    %789 = vmatprep.subr.bf16.mxu0 0
    %790 = vmatpush1.bf16.msra.mxu0 0
    %791 = vmatprep.mubr.bf16.mxu0 0
    %792 = vmatmul.mubr.bf16.gmra.mrb[0].mxu0 %v758
    %v793 = vpop.f32.mrb[0].mxu0
    %v794 = vadd.f32 0.0, %v793
    %v795 = vpop.f32.mrb[0].mxu0
    %v796 = vadd.f32 0.0, %v795
    %v797 = vpop.f32.mrb[0].mxu0
    %v798 = vpop.f32.mrb[0].mxu0
    %799 = vdwg.mxu0
    %800 = vmatprep.subr.bf16.mxu0 %v455
    %801 = vmatpush1.bf16.msra.mxu0 %v454
    %802 = vmatprep.subr.bf16.mxu0 %v459
    %803 = vmatpush1.bf16.msra.mxu0 %v458
    %804 = vmatprep.subr.bf16.mxu0 %v463
    %805 = vmatpush1.bf16.msra.mxu0 %v462
    %806 = vmatprep.subr.bf16.mxu0 %v467
    %807 = vmatpush1.bf16.msra.mxu0 %v466
    %808 = vmatprep.subr.bf16.mxu0 %v471
    %809 = vmatpush1.bf16.msra.mxu0 %v470
    %810 = vmatprep.subr.bf16.mxu0 %v475
    %811 = vmatpush1.bf16.msra.mxu0 %v474
    %812 = vmatprep.subr.bf16.mxu0 %v479
    %813 = vmatpush1.bf16.msra.mxu0 %v478
    %814 = vmatprep.subr.bf16.mxu0 %v483
    %815 = vmatpush1.bf16.msra.mxu0 %v482
    %816 = vmatprep.subr.bf16.mxu0 0
    %817 = vmatpush1.bf16.msra.mxu0 0
    %818 = vmatprep.subr.bf16.mxu0 0
    %819 = vmatpush1.bf16.msra.mxu0 0
    %820 = vmatprep.subr.bf16.mxu0 0
    %821 = vmatpush1.bf16.msra.mxu0 0
    %822 = vmatprep.subr.bf16.mxu0 0
    %823 = vmatpush1.bf16.msra.mxu0 0
    %824 = vmatprep.subr.bf16.mxu0 0
    %825 = vmatpush1.bf16.msra.mxu0 0
    %826 = vmatprep.subr.bf16.mxu0 0
    %827 = vmatpush1.bf16.msra.mxu0 0
    %828 = vmatprep.subr.bf16.mxu0 0
    %829 = vmatpush1.bf16.msra.mxu0 0
    %830 = vmatprep.subr.bf16.mxu0 0
    %831 = vmatpush1.bf16.msra.mxu0 0
    %832 = vmatprep.mubr.bf16.mxu0 0
    %833 = vmatmul.mubr.bf16.gmra.mrb[0].mxu0 %v758
    %v834 = vpop.f32.mrb[0].mxu0
    %v835 = vadd.f32 0.0, %v834
    %v836 = vpop.f32.mrb[0].mxu0
    %v837 = vadd.f32 0.0, %v836
    %v838 = vpop.f32.mrb[0].mxu0
    %v839 = vpop.f32.mrb[0].mxu0
    %840 = vdwg.mxu0
    %v841 = vadd.f32 %v252, %v794
    %v842 = vadd.f32 %v254, %v796
    %v843 = vadd.f32 %v325, %v835
    %v844 = vadd.f32 %v327, %v837
    %v845 = vxor.u32 %v841, 2147483648
    %v846 = vmul.f32 %v845, 1.442695
    %v847 = vpow.pop %v846
    %v848 = vadd.f32 %v847, 1.0
    %v849 = vrcp.pop %v848
    %v850 = vmul.f32 1.0, %v849
    %v851 = vxor.u32 %v842, 2147483648
    %v852 = vmul.f32 %v851, 1.442695
    %v853 = vpow.pop %v852
    %v854 = vadd.f32 %v853, 1.0
    %v855 = vrcp.pop %v854
    %v856 = vmul.f32 1.0, %v855
    %v857 = vtanh.pop %v843
    %v858 = vxor.u32 %v844, 2147483648
    %v859 = vmul.f32 %v858, 1.442695
    %v860 = vpow.pop %v859
    %v861 = vadd.f32 %v860, 1.0
    %v862 = vrcp.pop %v861
    %v863 = vmul.f32 1.0, %v862
    %v864 = vmul.f32 %v856, %v755
    %v865 = vmul.f32 %v850, %v857
    %v866 = vadd.f32 %v864, %v865
    %v867 = vtanh.pop %v866
    %v868 = vmul.f32 %v863, %v867
    %s869 = sadd.s32 %s95, 2
    %v870 = vstv %s869
    %vm871 = vcmp.lt.s32.totalorder %v870, %v62
    %v872 = vsel %vm871, 1, 0
    %873 = vset.pattern.permute.xlu0 0
    %874 = vperm.xlu0 %873, %v872
    %v875 = vpop.permute.xlu0 %874
    %vm876 = vcmp.eq.s32.totalorder %v875, 1
    %v877 = vsel %vm876, %v866, %v755
    %v878 = vsel %vm876, %v868, %v756
    %v879 = vsel %vm876, %v868, 0.0
    %v880 = vpack.c.bf16 %v878, %v878
    %881 = vmatprep.subr.bf16.mxu0 %v453
    %882 = vmatpush1.bf16.msra.mxu0 %v452
    %883 = vmatprep.subr.bf16.mxu0 %v457
    %884 = vmatpush1.bf16.msra.mxu0 %v456
    %885 = vmatprep.subr.bf16.mxu0 %v461
    %886 = vmatpush1.bf16.msra.mxu0 %v460
    %887 = vmatprep.subr.bf16.mxu0 %v465
    %888 = vmatpush1.bf16.msra.mxu0 %v464
    %889 = vmatprep.subr.bf16.mxu0 %v469
    %890 = vmatpush1.bf16.msra.mxu0 %v468
    %891 = vmatprep.subr.bf16.mxu0 %v473
    %892 = vmatpush1.bf16.msra.mxu0 %v472
    %893 = vmatprep.subr.bf16.mxu0 %v477
    %894 = vmatpush1.bf16.msra.mxu0 %v476
    %895 = vmatprep.subr.bf16.mxu0 %v481
    %896 = vmatpush1.bf16.msra.mxu0 %v480
    %897 = vmatprep.subr.bf16.mxu0 0
    %898 = vmatpush1.bf16.msra.mxu0 0
    %899 = vmatprep.subr.bf16.mxu0 0
    %900 = vmatpush1.bf16.msra.mxu0 0
    %901 = vmatprep.subr.bf16.mxu0 0
    %902 = vmatpush1.bf16.msra.mxu0 0
    %903 = vmatprep.subr.bf16.mxu0 0
    %904 = vmatpush1.bf16.msra.mxu0 0
    %905 = vmatprep.subr.bf16.mxu0 0
    %906 = vmatpush1.bf16.msra.mxu0 0
    %907 = vmatprep.subr.bf16.mxu0 0
    %908 = vmatpush1.bf16.msra.mxu0 0
    %909 = vmatprep.subr.bf16.mxu0 0
    %910 = vmatpush1.bf16.msra.mxu0 0
    %911 = vmatprep.subr.bf16.mxu0 0
    %912 = vmatpush1.bf16.msra.mxu0 0
    %913 = vmatprep.mubr.bf16.mxu0 0
    %914 = vmatmul.mubr.bf16.gmra.mrb[0].mxu0 %v880
    %v915 = vpop.f32.mrb[0].mxu0
    %v916 = vadd.f32 0.0, %v915
    %v917 = vpop.f32.mrb[0].mxu0
    %v918 = vadd.f32 0.0, %v917
    %v919 = vpop.f32.mrb[0].mxu0
    %v920 = vpop.f32.mrb[0].mxu0
    %921 = vdwg.mxu0
    %922 = vmatprep.subr.bf16.mxu0 %v455
    %923 = vmatpush1.bf16.msra.mxu0 %v454
    %924 = vmatprep.subr.bf16.mxu0 %v459
    %925 = vmatpush1.bf16.msra.mxu0 %v458
    %926 = vmatprep.subr.bf16.mxu0 %v463
    %927 = vmatpush1.bf16.msra.mxu0 %v462
    %928 = vmatprep.subr.bf16.mxu0 %v467
    %929 = vmatpush1.bf16.msra.mxu0 %v466
    %930 = vmatprep.subr.bf16.mxu0 %v471
    %931 = vmatpush1.bf16.msra.mxu0 %v470
    %932 = vmatprep.subr.bf16.mxu0 %v475
    %933 = vmatpush1.bf16.msra.mxu0 %v474
    %934 = vmatprep.subr.bf16.mxu0 %v479
    %935 = vmatpush1.bf16.msra.mxu0 %v478
    %936 = vmatprep.subr.bf16.mxu0 %v483
    %937 = vmatpush1.bf16.msra.mxu0 %v482
    %938 = vmatprep.subr.bf16.mxu0 0
    %939 = vmatpush1.bf16.msra.mxu0 0
    %940 = vmatprep.subr.bf16.mxu0 0
    %941 = vmatpush1.bf16.msra.mxu0 0
    %942 = vmatprep.subr.bf16.mxu0 0
    %943 = vmatpush1.bf16.msra.mxu0 0
    %944 = vmatprep.subr.bf16.mxu0 0
    %945 = vmatpush1.bf16.msra.mxu0 0
    %946 = vmatprep.subr.bf16.mxu0 0
    %947 = vmatpush1.bf16.msra.mxu0 0
    %948 = vmatprep.subr.bf16.mxu0 0
    %949 = vmatpush1.bf16.msra.mxu0 0
    %950 = vmatprep.subr.bf16.mxu0 0
    %951 = vmatpush1.bf16.msra.mxu0 0
    %952 = vmatprep.subr.bf16.mxu0 0
    %953 = vmatpush1.bf16.msra.mxu0 0
    %954 = vmatprep.mubr.bf16.mxu0 0
    %955 = vmatmul.mubr.bf16.gmra.mrb[0].mxu0 %v880
    %v956 = vpop.f32.mrb[0].mxu0
    %v957 = vadd.f32 0.0, %v956
    %v958 = vpop.f32.mrb[0].mxu0
    %v959 = vadd.f32 0.0, %v958
    %v960 = vpop.f32.mrb[0].mxu0
    %v961 = vpop.f32.mrb[0].mxu0
    %962 = vdwg.mxu0
    %v963 = vadd.f32 %v256, %v916
    %v964 = vadd.f32 %v258, %v918
    %v965 = vadd.f32 %v329, %v957
    %v966 = vadd.f32 %v331, %v959
    %v967 = vxor.u32 %v963, 2147483648
    %v968 = vmul.f32 %v967, 1.442695
    %v969 = vpow.pop %v968
    %v970 = vadd.f32 %v969, 1.0
    %v971 = vrcp.pop %v970
    %v972 = vmul.f32 1.0, %v971
    %v973 = vxor.u32 %v964, 2147483648
    %v974 = vmul.f32 %v973, 1.442695
    %v975 = vpow.pop %v974
    %v976 = vadd.f32 %v975, 1.0
    %v977 = vrcp.pop %v976
    %v978 = vmul.f32 1.0, %v977
    %v979 = vtanh.pop %v965
    %v980 = vxor.u32 %v966, 2147483648
    %v981 = vmul.f32 %v980, 1.442695
    %v982 = vpow.pop %v981
    %v983 = vadd.f32 %v982, 1.0
    %v984 = vrcp.pop %v983
    %v985 = vmul.f32 1.0, %v984
    %v986 = vmul.f32 %v978, %v877
    %v987 = vmul.f32 %v972, %v979
    %v988 = vadd.f32 %v986, %v987
    %v989 = vtanh.pop %v988
    %v990 = vmul.f32 %v985, %v989
    %s991 = sadd.s32 %s95, 3
    %v992 = vstv %s991
    %vm993 = vcmp.lt.s32.totalorder %v992, %v62
    %v994 = vsel %vm993, 1, 0
    %995 = vset.pattern.permute.xlu0 0
    %996 = vperm.xlu0 %995, %v994
    %v997 = vpop.permute.xlu0 %996
    %vm998 = vcmp.eq.s32.totalorder %v997, 1
    %v999 = vsel %vm998, %v988, %v877
    %v1000 = vsel %vm998, %v990, %v878
    %v1001 = vsel %vm998, %v990, 0.0
    %v1002 = vpack.c.bf16 %v1000, %v1000
    %1003 = vmatprep.subr.bf16.mxu0 %v453
    %1004 = vmatpush1.bf16.msra.mxu0 %v452
    %1005 = vmatprep.subr.bf16.mxu0 %v457
    %1006 = vmatpush1.bf16.msra.mxu0 %v456
    %1007 = vmatprep.subr.bf16.mxu0 %v461
    %1008 = vmatpush1.bf16.msra.mxu0 %v460
    %1009 = vmatprep.subr.bf16.mxu0 %v465
    %1010 = vmatpush1.bf16.msra.mxu0 %v464
    %1011 = vmatprep.subr.bf16.mxu0 %v469
    %1012 = vmatpush1.bf16.msra.mxu0 %v468
    %1013 = vmatprep.subr.bf16.mxu0 %v473
    %1014 = vmatpush1.bf16.msra.mxu0 %v472
    %1015 = vmatprep.subr.bf16.mxu0 %v477
    %1016 = vmatpush1.bf16.msra.mxu0 %v476
    %1017 = vmatprep.subr.bf16.mxu0 %v481
    %1018 = vmatpush1.bf16.msra.mxu0 %v480
    %1019 = vmatprep.subr.bf16.mxu0 0
    %1020 = vmatpush1.bf16.msra.mxu0 0
    %1021 = vmatprep.subr.bf16.mxu0 0
    %1022 = vmatpush1.bf16.msra.mxu0 0
    %1023 = vmatprep.subr.bf16.mxu0 0
    %1024 = vmatpush1.bf16.msra.mxu0 0
    %1025 = vmatprep.subr.bf16.mxu0 0
    %1026 = vmatpush1.bf16.msra.mxu0 0
    %1027 = vmatprep.subr.bf16.mxu0 0
    %1028 = vmatpush1.bf16.msra.mxu0 0
    %1029 = vmatprep.subr.bf16.mxu0 0
    %1030 = vmatpush1.bf16.msra.mxu0 0
    %1031 = vmatprep.subr.bf16.mxu0 0
    %1032 = vmatpush1.bf16.msra.mxu0 0
    %1033 = vmatprep.subr.bf16.mxu0 0
    %1034 = vmatpush1.bf16.msra.mxu0 0
    %1035 = vmatprep.mubr.bf16.mxu0 0
    %1036 = vmatmul.mubr.bf16.gmra.mrb[0].mxu0 %v1002
    %v1037 = vpop.f32.mrb[0].mxu0
    %v1038 = vadd.f32 0.0, %v1037
    %v1039 = vpop.f32.mrb[0].mxu0
    %v1040 = vadd.f32 0.0, %v1039
    %v1041 = vpop.f32.mrb[0].mxu0
    %v1042 = vpop.f32.mrb[0].mxu0
    %1043 = vdwg.mxu0
    %1044 = vmatprep.subr.bf16.mxu0 %v455
    %1045 = vmatpush1.bf16.msra.mxu0 %v454
    %1046 = vmatprep.subr.bf16.mxu0 %v459
    %1047 = vmatpush1.bf16.msra.mxu0 %v458
    %1048 = vmatprep.subr.bf16.mxu0 %v463
    %1049 = vmatpush1.bf16.msra.mxu0 %v462
    %1050 = vmatprep.subr.bf16.mxu0 %v467
    %1051 = vmatpush1.bf16.msra.mxu0 %v466
    %1052 = vmatprep.subr.bf16.mxu0 %v471
    %1053 = vmatpush1.bf16.msra.mxu0 %v470
    %1054 = vmatprep.subr.bf16.mxu0 %v475
    %1055 = vmatpush1.bf16.msra.mxu0 %v474
    %1056 = vmatprep.subr.bf16.mxu0 %v479
    %1057 = vmatpush1.bf16.msra.mxu0 %v478
    %1058 = vmatprep.subr.bf16.mxu0 %v483
    %1059 = vmatpush1.bf16.msra.mxu0 %v482
    %1060 = vmatprep.subr.bf16.mxu0 0
    %1061 = vmatpush1.bf16.msra.mxu0 0
    %1062 = vmatprep.subr.bf16.mxu0 0
    %1063 = vmatpush1.bf16.msra.mxu0 0
    %1064 = vmatprep.subr.bf16.mxu0 0
    %1065 = vmatpush1.bf16.msra.mxu0 0
    %1066 = vmatprep.subr.bf16.mxu0 0
    %1067 = vmatpush1.bf16.msra.mxu0 0
    %1068 = vmatprep.subr.bf16.mxu0 0
    %1069 = vmatpush1.bf16.msra.mxu0 0
    %1070 = vmatprep.subr.bf16.mxu0 0
    %1071 = vmatpush1.bf16.msra.mxu0 0
    %1072 = vmatprep.subr.bf16.mxu0 0
    %1073 = vmatpush1.bf16.msra.mxu0 0
    %1074 = vmatprep.subr.bf16.mxu0 0
    %1075 = vmatpush1.bf16.msra.mxu0 0
    %1076 = vmatprep.mubr.bf16.mxu0 0
    %1077 = vmatmul.mubr.bf16.gmra.mrb[0].mxu0 %v1002
    %v1078 = vpop.f32.mrb[0].mxu0
    %v1079 = vadd.f32 0.0, %v1078
    %v1080 = vpop.f32.mrb[0].mxu0
    %v1081 = vadd.f32 0.0, %v1080
    %v1082 = vpop.f32.mrb[0].mxu0
    %v1083 = vpop.f32.mrb[0].mxu0
    %1084 = vdwg.mxu0
    %v1085 = vadd.f32 %v262, %v1038
    %v1086 = vadd.f32 %v264, %v1040
    %v1087 = vadd.f32 %v335, %v1079
    %v1088 = vadd.f32 %v337, %v1081
    %v1089 = vxor.u32 %v1085, 2147483648
    %v1090 = vmul.f32 %v1089, 1.442695
    %v1091 = vpow.pop %v1090
    %v1092 = vadd.f32 %v1091, 1.0
    %v1093 = vrcp.pop %v1092
    %v1094 = vmul.f32 1.0, %v1093
    %v1095 = vxor.u32 %v1086, 2147483648
    %v1096 = vmul.f32 %v1095, 1.442695
    %v1097 = vpow.pop %v1096
    %v1098 = vadd.f32 %v1097, 1.0
    %v1099 = vrcp.pop %v1098
    %v1100 = vmul.f32 1.0, %v1099
    %v1101 = vtanh.pop %v1087
    %v1102 = vxor.u32 %v1088, 2147483648
    %v1103 = vmul.f32 %v1102, 1.442695
    %v1104 = vpow.pop %v1103
    %v1105 = vadd.f32 %v1104, 1.0
    %v1106 = vrcp.pop %v1105
    %v1107 = vmul.f32 1.0, %v1106
    %v1108 = vmul.f32 %v1100, %v999
    %v1109 = vmul.f32 %v1094, %v1101
    %v1110 = vadd.f32 %v1108, %v1109
    %v1111 = vtanh.pop %v1110
    %v1112 = vmul.f32 %v1107, %v1111
    %s1113 = sadd.s32 %s95, 4
    %v1114 = vstv %s1113
    %vm1115 = vcmp.lt.s32.totalorder %v1114, %v62
    %v1116 = vsel %vm1115, 1, 0
    %1117 = vset.pattern.permute.xlu0 0
    %1118 = vperm.xlu0 %1117, %v1116
    %v1119 = vpop.permute.xlu0 %1118
    %vm1120 = vcmp.eq.s32.totalorder %v1119, 1
    %v1121 = vsel %vm1120, %v1110, %v999
    %v1122 = vsel %vm1120, %v1112, %v1000
    %v1123 = vsel %vm1120, %v1112, 0.0
    %v1124 = vpack.c.bf16 %v1122, %v1122
    %1125 = vmatprep.subr.bf16.mxu0 %v453
    %1126 = vmatpush1.bf16.msra.mxu0 %v452
    %1127 = vmatprep.subr.bf16.mxu0 %v457
    %1128 = vmatpush1.bf16.msra.mxu0 %v456
    %1129 = vmatprep.subr.bf16.mxu0 %v461
    %1130 = vmatpush1.bf16.msra.mxu0 %v460
    %1131 = vmatprep.subr.bf16.mxu0 %v465
    %1132 = vmatpush1.bf16.msra.mxu0 %v464
    %1133 = vmatprep.subr.bf16.mxu0 %v469
    %1134 = vmatpush1.bf16.msra.mxu0 %v468
    %1135 = vmatprep.subr.bf16.mxu0 %v473
    %1136 = vmatpush1.bf16.msra.mxu0 %v472
    %1137 = vmatprep.subr.bf16.mxu0 %v477
    %1138 = vmatpush1.bf16.msra.mxu0 %v476
    %1139 = vmatprep.subr.bf16.mxu0 %v481
    %1140 = vmatpush1.bf16.msra.mxu0 %v480
    %1141 = vmatprep.subr.bf16.mxu0 0
    %1142 = vmatpush1.bf16.msra.mxu0 0
    %1143 = vmatprep.subr.bf16.mxu0 0
    %1144 = vmatpush1.bf16.msra.mxu0 0
    %1145 = vmatprep.subr.bf16.mxu0 0
    %1146 = vmatpush1.bf16.msra.mxu0 0
    %1147 = vmatprep.subr.bf16.mxu0 0
    %1148 = vmatpush1.bf16.msra.mxu0 0
    %1149 = vmatprep.subr.bf16.mxu0 0
    %1150 = vmatpush1.bf16.msra.mxu0 0
    %1151 = vmatprep.subr.bf16.mxu0 0
    %1152 = vmatpush1.bf16.msra.mxu0 0
    %1153 = vmatprep.subr.bf16.mxu0 0
    %1154 = vmatpush1.bf16.msra.mxu0 0
    %1155 = vmatprep.subr.bf16.mxu0 0
    %1156 = vmatpush1.bf16.msra.mxu0 0
    %1157 = vmatprep.mubr.bf16.mxu0 0
    %1158 = vmatmul.mubr.bf16.gmra.mrb[0].mxu0 %v1124
    %v1159 = vpop.f32.mrb[0].mxu0
    %v1160 = vadd.f32 0.0, %v1159
    %v1161 = vpop.f32.mrb[0].mxu0
    %v1162 = vadd.f32 0.0, %v1161
    %v1163 = vpop.f32.mrb[0].mxu0
    %v1164 = vpop.f32.mrb[0].mxu0
    %1165 = vdwg.mxu0
    %1166 = vmatprep.subr.bf16.mxu0 %v455
    %1167 = vmatpush1.bf16.msra.mxu0 %v454
    %1168 = vmatprep.subr.bf16.mxu0 %v459
    %1169 = vmatpush1.bf16.msra.mxu0 %v458
    %1170 = vmatprep.subr.bf16.mxu0 %v463
    %1171 = vmatpush1.bf16.msra.mxu0 %v462
    %1172 = vmatprep.subr.bf16.mxu0 %v467
    %1173 = vmatpush1.bf16.msra.mxu0 %v466
    %1174 = vmatprep.subr.bf16.mxu0 %v471
    %1175 = vmatpush1.bf16.msra.mxu0 %v470
    %1176 = vmatprep.subr.bf16.mxu0 %v475
    %1177 = vmatpush1.bf16.msra.mxu0 %v474
    %1178 = vmatprep.subr.bf16.mxu0 %v479
    %1179 = vmatpush1.bf16.msra.mxu0 %v478
    %1180 = vmatprep.subr.bf16.mxu0 %v483
    %1181 = vmatpush1.bf16.msra.mxu0 %v482
    %1182 = vmatprep.subr.bf16.mxu0 0
    %1183 = vmatpush1.bf16.msra.mxu0 0
    %1184 = vmatprep.subr.bf16.mxu0 0
    %1185 = vmatpush1.bf16.msra.mxu0 0
    %1186 = vmatprep.subr.bf16.mxu0 0
    %1187 = vmatpush1.bf16.msra.mxu0 0
    %1188 = vmatprep.subr.bf16.mxu0 0
    %1189 = vmatpush1.bf16.msra.mxu0 0
    %1190 = vmatprep.subr.bf16.mxu0 0
    %1191 = vmatpush1.bf16.msra.mxu0 0
    %1192 = vmatprep.subr.bf16.mxu0 0
    %1193 = vmatpush1.bf16.msra.mxu0 0
    %1194 = vmatprep.subr.bf16.mxu0 0
    %1195 = vmatpush1.bf16.msra.mxu0 0
    %1196 = vmatprep.subr.bf16.mxu0 0
    %1197 = vmatpush1.bf16.msra.mxu0 0
    %1198 = vmatprep.mubr.bf16.mxu0 0
    %1199 = vmatmul.mubr.bf16.gmra.mrb[0].mxu0 %v1124
    %v1200 = vpop.f32.mrb[0].mxu0
    %v1201 = vadd.f32 0.0, %v1200
    %v1202 = vpop.f32.mrb[0].mxu0
    %v1203 = vadd.f32 0.0, %v1202
    %v1204 = vpop.f32.mrb[0].mxu0
    %v1205 = vpop.f32.mrb[0].mxu0
    %1206 = vdwg.mxu0
    %v1207 = vadd.f32 %v266, %v1160
    %v1208 = vadd.f32 %v268, %v1162
    %v1209 = vadd.f32 %v339, %v1201
    %v1210 = vadd.f32 %v341, %v1203
    %v1211 = vxor.u32 %v1207, 2147483648
    %v1212 = vmul.f32 %v1211, 1.442695
    %v1213 = vpow.pop %v1212
    %v1214 = vadd.f32 %v1213, 1.0
    %v1215 = vrcp.pop %v1214
    %v1216 = vmul.f32 1.0, %v1215
    %v1217 = vxor.u32 %v1208, 2147483648
    %v1218 = vmul.f32 %v1217, 1.442695
    %v1219 = vpow.pop %v1218
    %v1220 = vadd.f32 %v1219, 1.0
    %v1221 = vrcp.pop %v1220
    %v1222 = vmul.f32 1.0, %v1221
    %v1223 = vtanh.pop %v1209
    %v1224 = vxor.u32 %v1210, 2147483648
    %v1225 = vmul.f32 %v1224, 1.442695
    %v1226 = vpow.pop %v1225
    %v1227 = vadd.f32 %v1226, 1.0
    %v1228 = vrcp.pop %v1227
    %v1229 = vmul.f32 1.0, %v1228
    %v1230 = vmul.f32 %v1222, %v1121
    %v1231 = vmul.f32 %v1216, %v1223
    %v1232 = vadd.f32 %v1230, %v1231
    %v1233 = vtanh.pop %v1232
    %v1234 = vmul.f32 %v1229, %v1233
    %s1235 = sadd.s32 %s95, 5
    %v1236 = vstv %s1235
    %vm1237 = vcmp.lt.s32.totalorder %v1236, %v62
    %v1238 = vsel %vm1237, 1, 0
    %1239 = vset.pattern.permute.xlu0 0
    %1240 = vperm.xlu0 %1239, %v1238
    %v1241 = vpop.permute.xlu0 %1240
    %vm1242 = vcmp.eq.s32.totalorder %v1241, 1
    %v1243 = vsel %vm1242, %v1232, %v1121
    %v1244 = vsel %vm1242, %v1234, %v1122
    %v1245 = vsel %vm1242, %v1234, 0.0
    %v1246 = vpack.c.bf16 %v1244, %v1244
    %1247 = vmatprep.subr.bf16.mxu0 %v453
    %1248 = vmatpush1.bf16.msra.mxu0 %v452
    %1249 = vmatprep.subr.bf16.mxu0 %v457
    %1250 = vmatpush1.bf16.msra.mxu0 %v456
    %1251 = vmatprep.subr.bf16.mxu0 %v461
    %1252 = vmatpush1.bf16.msra.mxu0 %v460
    %1253 = vmatprep.subr.bf16.mxu0 %v465
    %1254 = vmatpush1.bf16.msra.mxu0 %v464
    %1255 = vmatprep.subr.bf16.mxu0 %v469
    %1256 = vmatpush1.bf16.msra.mxu0 %v468
    %1257 = vmatprep.subr.bf16.mxu0 %v473
    %1258 = vmatpush1.bf16.msra.mxu0 %v472
    %1259 = vmatprep.subr.bf16.mxu0 %v477
    %1260 = vmatpush1.bf16.msra.mxu0 %v476
    %1261 = vmatprep.subr.bf16.mxu0 %v481
    %1262 = vmatpush1.bf16.msra.mxu0 %v480
    %1263 = vmatprep.subr.bf16.mxu0 0
    %1264 = vmatpush1.bf16.msra.mxu0 0
    %1265 = vmatprep.subr.bf16.mxu0 0
    %1266 = vmatpush1.bf16.msra.mxu0 0
    %1267 = vmatprep.subr.bf16.mxu0 0
    %1268 = vmatpush1.bf16.msra.mxu0 0
    %1269 = vmatprep.subr.bf16.mxu0 0
    %1270 = vmatpush1.bf16.msra.mxu0 0
    %1271 = vmatprep.subr.bf16.mxu0 0
    %1272 = vmatpush1.bf16.msra.mxu0 0
    %1273 = vmatprep.subr.bf16.mxu0 0
    %1274 = vmatpush1.bf16.msra.mxu0 0
    %1275 = vmatprep.subr.bf16.mxu0 0
    %1276 = vmatpush1.bf16.msra.mxu0 0
    %1277 = vmatprep.subr.bf16.mxu0 0
    %1278 = vmatpush1.bf16.msra.mxu0 0
    %1279 = vmatprep.mubr.bf16.mxu0 0
    %1280 = vmatmul.mubr.bf16.gmra.mrb[0].mxu0 %v1246
    %v1281 = vpop.f32.mrb[0].mxu0
    %v1282 = vadd.f32 0.0, %v1281
    %v1283 = vpop.f32.mrb[0].mxu0
    %v1284 = vadd.f32 0.0, %v1283
    %v1285 = vpop.f32.mrb[0].mxu0
    %v1286 = vpop.f32.mrb[0].mxu0
    %1287 = vdwg.mxu0
    %1288 = vmatprep.subr.bf16.mxu0 %v455
    %1289 = vmatpush1.bf16.msra.mxu0 %v454
    %1290 = vmatprep.subr.bf16.mxu0 %v459
    %1291 = vmatpush1.bf16.msra.mxu0 %v458
    %1292 = vmatprep.subr.bf16.mxu0 %v463
    %1293 = vmatpush1.bf16.msra.mxu0 %v462
    %1294 = vmatprep.subr.bf16.mxu0 %v467
    %1295 = vmatpush1.bf16.msra.mxu0 %v466
    %1296 = vmatprep.subr.bf16.mxu0 %v471
    %1297 = vmatpush1.bf16.msra.mxu0 %v470
    %1298 = vmatprep.subr.bf16.mxu0 %v475
    %1299 = vmatpush1.bf16.msra.mxu0 %v474
    %1300 = vmatprep.subr.bf16.mxu0 %v479
    %1301 = vmatpush1.bf16.msra.mxu0 %v478
    %1302 = vmatprep.subr.bf16.mxu0 %v483
    %1303 = vmatpush1.bf16.msra.mxu0 %v482
    %1304 = vmatprep.subr.bf16.mxu0 0
    %1305 = vmatpush1.bf16.msra.mxu0 0
    %1306 = vmatprep.subr.bf16.mxu0 0
    %1307 = vmatpush1.bf16.msra.mxu0 0
    %1308 = vmatprep.subr.bf16.mxu0 0
    %1309 = vmatpush1.bf16.msra.mxu0 0
    %1310 = vmatprep.subr.bf16.mxu0 0
    %1311 = vmatpush1.bf16.msra.mxu0 0
    %1312 = vmatprep.subr.bf16.mxu0 0
    %1313 = vmatpush1.bf16.msra.mxu0 0
    %1314 = vmatprep.subr.bf16.mxu0 0
    %1315 = vmatpush1.bf16.msra.mxu0 0
    %1316 = vmatprep.subr.bf16.mxu0 0
    %1317 = vmatpush1.bf16.msra.mxu0 0
    %1318 = vmatprep.subr.bf16.mxu0 0
    %1319 = vmatpush1.bf16.msra.mxu0 0
    %1320 = vmatprep.mubr.bf16.mxu0 0
    %1321 = vmatmul.mubr.bf16.gmra.mrb[0].mxu0 %v1246
    %v1322 = vpop.f32.mrb[0].mxu0
    %v1323 = vadd.f32 0.0, %v1322
    %v1324 = vpop.f32.mrb[0].mxu0
    %v1325 = vadd.f32 0.0, %v1324
    %v1326 = vpop.f32.mrb[0].mxu0
    %v1327 = vpop.f32.mrb[0].mxu0
    %1328 = vdwg.mxu0
    %v1329 = vadd.f32 %v272, %v1282
    %v1330 = vadd.f32 %v274, %v1284
    %v1331 = vadd.f32 %v345, %v1323
    %v1332 = vadd.f32 %v347, %v1325
    %v1333 = vxor.u32 %v1329, 2147483648
    %v1334 = vmul.f32 %v1333, 1.442695
    %v1335 = vpow.pop %v1334
    %v1336 = vadd.f32 %v1335, 1.0
    %v1337 = vrcp.pop %v1336
    %v1338 = vmul.f32 1.0, %v1337
    %v1339 = vxor.u32 %v1330, 2147483648
    %v1340 = vmul.f32 %v1339, 1.442695
    %v1341 = vpow.pop %v1340
    %v1342 = vadd.f32 %v1341, 1.0
    %v1343 = vrcp.pop %v1342
    %v1344 = vmul.f32 1.0, %v1343
    %v1345 = vtanh.pop %v1331
    %v1346 = vxor.u32 %v1332, 2147483648
    %v1347 = vmul.f32 %v1346, 1.442695
    %v1348 = vpow.pop %v1347
    %v1349 = vadd.f32 %v1348, 1.0
    %v1350 = vrcp.pop %v1349
    %v1351 = vmul.f32 1.0, %v1350
    %v1352 = vmul.f32 %v1344, %v1243
    %v1353 = vmul.f32 %v1338, %v1345
    %v1354 = vadd.f32 %v1352, %v1353
    %v1355 = vtanh.pop %v1354
    %v1356 = vmul.f32 %v1351, %v1355
    %s1357 = sadd.s32 %s95, 6
    %v1358 = vstv %s1357
    %vm1359 = vcmp.lt.s32.totalorder %v1358, %v62
    %v1360 = vsel %vm1359, 1, 0
    %1361 = vset.pattern.permute.xlu0 0
    %1362 = vperm.xlu0 %1361, %v1360
    %v1363 = vpop.permute.xlu0 %1362
    %vm1364 = vcmp.eq.s32.totalorder %v1363, 1
    %v1365 = vsel %vm1364, %v1354, %v1243
    %v1366 = vsel %vm1364, %v1356, %v1244
    %v1367 = vsel %vm1364, %v1356, 0.0
    %v1368 = vpack.c.bf16 %v1366, %v1366
    %1369 = vmatprep.subr.bf16.mxu0 %v453
    %1370 = vmatpush1.bf16.msra.mxu0 %v452
    %1371 = vmatprep.subr.bf16.mxu0 %v457
    %1372 = vmatpush1.bf16.msra.mxu0 %v456
    %1373 = vmatprep.subr.bf16.mxu0 %v461
    %1374 = vmatpush1.bf16.msra.mxu0 %v460
    %1375 = vmatprep.subr.bf16.mxu0 %v465
    %1376 = vmatpush1.bf16.msra.mxu0 %v464
    %1377 = vmatprep.subr.bf16.mxu0 %v469
    %1378 = vmatpush1.bf16.msra.mxu0 %v468
    %1379 = vmatprep.subr.bf16.mxu0 %v473
    %1380 = vmatpush1.bf16.msra.mxu0 %v472
    %1381 = vmatprep.subr.bf16.mxu0 %v477
    %1382 = vmatpush1.bf16.msra.mxu0 %v476
    %1383 = vmatprep.subr.bf16.mxu0 %v481
    %1384 = vmatpush1.bf16.msra.mxu0 %v480
    %1385 = vmatprep.subr.bf16.mxu0 0
    %1386 = vmatpush1.bf16.msra.mxu0 0
    %1387 = vmatprep.subr.bf16.mxu0 0
    %1388 = vmatpush1.bf16.msra.mxu0 0
    %1389 = vmatprep.subr.bf16.mxu0 0
    %1390 = vmatpush1.bf16.msra.mxu0 0
    %1391 = vmatprep.subr.bf16.mxu0 0
    %1392 = vmatpush1.bf16.msra.mxu0 0
    %1393 = vmatprep.subr.bf16.mxu0 0
    %1394 = vmatpush1.bf16.msra.mxu0 0
    %1395 = vmatprep.subr.bf16.mxu0 0
    %1396 = vmatpush1.bf16.msra.mxu0 0
    %1397 = vmatprep.subr.bf16.mxu0 0
    %1398 = vmatpush1.bf16.msra.mxu0 0
    %1399 = vmatprep.subr.bf16.mxu0 0
    %1400 = vmatpush1.bf16.msra.mxu0 0
    %1401 = vmatprep.mubr.bf16.mxu0 0
    %1402 = vmatmul.mubr.bf16.gmra.mrb[0].mxu0 %v1368
    %v1403 = vpop.f32.mrb[0].mxu0
    %v1404 = vadd.f32 0.0, %v1403
    %v1405 = vpop.f32.mrb[0].mxu0
    %v1406 = vadd.f32 0.0, %v1405
    %v1407 = vpop.f32.mrb[0].mxu0
    %v1408 = vpop.f32.mrb[0].mxu0
    %1409 = vdwg.mxu0
    %1410 = vmatprep.subr.bf16.mxu0 %v455
    %1411 = vmatpush1.bf16.msra.mxu0 %v454
    %1412 = vmatprep.subr.bf16.mxu0 %v459
    %1413 = vmatpush1.bf16.msra.mxu0 %v458
    %1414 = vmatprep.subr.bf16.mxu0 %v463
    %1415 = vmatpush1.bf16.msra.mxu0 %v462
    %1416 = vmatprep.subr.bf16.mxu0 %v467
    %1417 = vmatpush1.bf16.msra.mxu0 %v466
    %1418 = vmatprep.subr.bf16.mxu0 %v471
    %1419 = vmatpush1.bf16.msra.mxu0 %v470
    %1420 = vmatprep.subr.bf16.mxu0 %v475
    %1421 = vmatpush1.bf16.msra.mxu0 %v474
    %1422 = vmatprep.subr.bf16.mxu0 %v479
    %1423 = vmatpush1.bf16.msra.mxu0 %v478
    %1424 = vmatprep.subr.bf16.mxu0 %v483
    %1425 = vmatpush1.bf16.msra.mxu0 %v482
    %1426 = vmatprep.subr.bf16.mxu0 0
    %1427 = vmatpush1.bf16.msra.mxu0 0
    %1428 = vmatprep.subr.bf16.mxu0 0
    %1429 = vmatpush1.bf16.msra.mxu0 0
    %1430 = vmatprep.subr.bf16.mxu0 0
    %1431 = vmatpush1.bf16.msra.mxu0 0
    %1432 = vmatprep.subr.bf16.mxu0 0
    %1433 = vmatpush1.bf16.msra.mxu0 0
    %1434 = vmatprep.subr.bf16.mxu0 0
    %1435 = vmatpush1.bf16.msra.mxu0 0
    %1436 = vmatprep.subr.bf16.mxu0 0
    %1437 = vmatpush1.bf16.msra.mxu0 0
    %1438 = vmatprep.subr.bf16.mxu0 0
    %1439 = vmatpush1.bf16.msra.mxu0 0
    %1440 = vmatprep.subr.bf16.mxu0 0
    %1441 = vmatpush1.bf16.msra.mxu0 0
    %1442 = vmatprep.mubr.bf16.mxu0 0
    %1443 = vmatmul.mubr.bf16.gmra.mrb[0].mxu0 %v1368
    %v1444 = vpop.f32.mrb[0].mxu0
    %v1445 = vadd.f32 0.0, %v1444
    %v1446 = vpop.f32.mrb[0].mxu0
    %v1447 = vadd.f32 0.0, %v1446
    %v1448 = vpop.f32.mrb[0].mxu0
    %v1449 = vpop.f32.mrb[0].mxu0
    %1450 = vdwg.mxu0
    %v1451 = vadd.f32 %v276, %v1404
    %v1452 = vadd.f32 %v278, %v1406
    %v1453 = vadd.f32 %v349, %v1445
    %v1454 = vadd.f32 %v351, %v1447
    %v1455 = vxor.u32 %v1451, 2147483648
    %v1456 = vmul.f32 %v1455, 1.442695
    %v1457 = vpow.pop %v1456
    %v1458 = vadd.f32 %v1457, 1.0
    %v1459 = vrcp.pop %v1458
    %v1460 = vmul.f32 1.0, %v1459
    %v1461 = vxor.u32 %v1452, 2147483648
    %v1462 = vmul.f32 %v1461, 1.442695
    %v1463 = vpow.pop %v1462
    %v1464 = vadd.f32 %v1463, 1.0
    %v1465 = vrcp.pop %v1464
    %v1466 = vmul.f32 1.0, %v1465
    %v1467 = vtanh.pop %v1453
    %v1468 = vxor.u32 %v1454, 2147483648
    %v1469 = vmul.f32 %v1468, 1.442695
    %v1470 = vpow.pop %v1469
    %v1471 = vadd.f32 %v1470, 1.0
    %v1472 = vrcp.pop %v1471
    %v1473 = vmul.f32 1.0, %v1472
    %v1474 = vmul.f32 %v1466, %v1365
    %v1475 = vmul.f32 %v1460, %v1467
    %v1476 = vadd.f32 %v1474, %v1475
    %v1477 = vtanh.pop %v1476
    %v1478 = vmul.f32 %v1473, %v1477
    %s1479 = sadd.s32 %s95, 7
    %v1480 = vstv %s1479
    %vm1481 = vcmp.lt.s32.totalorder %v1480, %v62
    %v1482 = vsel %vm1481, 1, 0
    %1483 = vset.pattern.permute.xlu0 0
    %1484 = vperm.xlu0 %1483, %v1482
    %v1485 = vpop.permute.xlu0 %1484
    %vm1486 = vcmp.eq.s32.totalorder %v1485, 1
    %v1487 = vsel %vm1486, %v1476, %v1365
    %v1488 = vsel %vm1486, %v1478, %v1366
    %v1489 = vsel %vm1486, %v1478, 0.0
    %1490 = vst [vmem:[#allocation2] sm:$0xff] %v1488
    %1491 = vst [vmem:[#allocation3] sm:$0xff] %v1487
    %v1492 = vpack.c.bf16 %v757, %v635
    %v1493 = vpack.c.bf16 %v1001, %v879
    %v1494 = vpack.c.bf16 %v1245, %v1123
    %v1495 = vpack.c.bf16 %v1489, %v1367
    %v1496 = vld [vmem:[#allocation7] sm:$0xf]
    %v1497 = vld [vmem:[#allocation7 + $0x4] sm:$0xf]
    %v1498 = vld [vmem:[#allocation7 + $0x8] sm:$0xf]
    %v1499 = vld [vmem:[#allocation7 + $0xc] sm:$0xf]
    %v1500 = vld [vmem:[#allocation7 + $0x10] sm:$0xf]
    %v1501 = vld [vmem:[#allocation7 + $0x14] sm:$0xf]
    %v1502 = vld [vmem:[#allocation7 + $0x18] sm:$0xf]
    %v1503 = vld [vmem:[#allocation7 + $0x1c] sm:$0xf]
    %v1504 = vld [vmem:[#allocation7 + $0x20] sm:$0xf]
    %v1505 = vld [vmem:[#allocation7 + $0x24] sm:$0xf]
    %v1506 = vld [vmem:[#allocation7 + $0x28] sm:$0xf]
    %v1507 = vld [vmem:[#allocation7 + $0x2c] sm:$0xf]
    %v1508 = vld [vmem:[#allocation7 + $0x30] sm:$0xf]
    %v1509 = vld [vmem:[#allocation7 + $0x34] sm:$0xf]
    %v1510 = vld [vmem:[#allocation7 + $0x38] sm:$0xf]
    %v1511 = vld [vmem:[#allocation7 + $0x3c] sm:$0xf]
    %v1512 = vld [vmem:[%s6] sm:$0x1]
    %v1514 = vlaneseq
    %v1515 = vshrl.u32 %v1514, 7
    %v1516 = vsub.s32 0, %v1515
    %v1517 = vrot.slane %v1512, %v1516
    %v1535 = vunpack.c.l.b16 %v1496
    %v1536 = vunpack.c.l.b16 %v1497
    %v1537 = vunpack.c.l.b16 %v1498
    %v1538 = vunpack.c.l.b16 %v1499
    %v1539 = vunpack.c.l.b16 %v1500
    %v1540 = vunpack.c.l.b16 %v1501
    %v1541 = vunpack.c.l.b16 %v1502
    %v1542 = vunpack.c.l.b16 %v1503
    %v1543 = vunpack.c.l.b16 %v1504
    %v1544 = vunpack.c.l.b16 %v1505
    %v1545 = vunpack.c.l.b16 %v1506
    %v1546 = vunpack.c.l.b16 %v1507
    %v1547 = vunpack.c.l.b16 %v1508
    %v1548 = vunpack.c.l.b16 %v1509
    %v1549 = vunpack.c.l.b16 %v1510
    %v1550 = vunpack.c.l.b16 %v1511
    %v1551 = vpack.c.b16 %v1536, %v1535
    %v1552 = vpack.c.b16 %v1538, %v1537
    %v1553 = vpack.c.b16 %v1540, %v1539
    %v1554 = vpack.c.b16 %v1542, %v1541
    %v1555 = vpack.c.b16 %v1544, %v1543
    %v1556 = vpack.c.b16 %v1546, %v1545
    %v1557 = vpack.c.b16 %v1548, %v1547
    %v1558 = vpack.c.b16 %v1550, %v1549
    %1567 = vmatprep.subr.bf16.mxu0 0
    %1568 = vmatpush1.bf16.msra.mxu0 %v1551
    %1569 = vmatprep.subr.bf16.mxu0 0
    %1570 = vmatpush1.bf16.msra.mxu0 %v1552
    %1571 = vmatprep.subr.bf16.mxu0 0
    %1572 = vmatpush1.bf16.msra.mxu0 %v1553
    %1573 = vmatprep.subr.bf16.mxu0 0
    %1574 = vmatpush1.bf16.msra.mxu0 %v1554
    %1575 = vmatprep.subr.bf16.mxu0 0
    %1576 = vmatpush1.bf16.msra.mxu0 %v1555
    %1577 = vmatprep.subr.bf16.mxu0 0
    %1578 = vmatpush1.bf16.msra.mxu0 %v1556
    %1579 = vmatprep.subr.bf16.mxu0 0
    %1580 = vmatpush1.bf16.msra.mxu0 %v1557
    %1581 = vmatprep.subr.bf16.mxu0 0
    %1582 = vmatpush1.bf16.msra.mxu0 %v1558
    %1583 = vmatprep.subr.bf16.mxu0 0
    %1584 = vmatpush1.bf16.msra.mxu0 0
    %1585 = vmatprep.subr.bf16.mxu0 0
    %1586 = vmatpush1.bf16.msra.mxu0 0
    %1587 = vmatprep.subr.bf16.mxu0 0
    %1588 = vmatpush1.bf16.msra.mxu0 0
    %1589 = vmatprep.subr.bf16.mxu0 0
    %1590 = vmatpush1.bf16.msra.mxu0 0
    %1591 = vmatprep.subr.bf16.mxu0 0
    %1592 = vmatpush1.bf16.msra.mxu0 0
    %1593 = vmatprep.subr.bf16.mxu0 0
    %1594 = vmatpush1.bf16.msra.mxu0 0
    %1595 = vmatprep.subr.bf16.mxu0 0
    %1596 = vmatpush1.bf16.msra.mxu0 0
    %1597 = vmatprep.subr.bf16.mxu0 0
    %1598 = vmatpush1.bf16.msra.mxu0 0
    %1599 = vmatprep.mubr.bf16.mxu0 0
    %1600 = vmatmul.mubr.bf16.gmra.mrb[0].mxu0 %v1492
    %v1601 = vpop.f32.mrb[0].mxu0
    %v1602 = vadd.f32 %v1517, %v1601
    %v1603 = vpop.f32.mrb[0].mxu0
    %v1604 = vpop.f32.mrb[0].mxu0
    %v1605 = vadd.f32 %v1517, %v1604
    %v1606 = vpop.f32.mrb[0].mxu0
    %1607 = vmatprep.mubr.bf16.mxu0 0
    %1608 = vmatmul.mubr.bf16.gmra.mrb[0].mxu0 %v1493
    %v1609 = vpop.f32.mrb[0].mxu0
    %v1610 = vadd.f32 %v1517, %v1609
    %v1611 = vpop.f32.mrb[0].mxu0
    %v1612 = vpop.f32.mrb[0].mxu0
    %v1613 = vadd.f32 %v1517, %v1612
    %v1614 = vpop.f32.mrb[0].mxu0
    %1615 = vmatprep.mubr.bf16.mxu0 0
    %1616 = vmatmul.mubr.bf16.gmra.mrb[0].mxu0 %v1494
    %v1617 = vpop.f32.mrb[0].mxu0
    %v1618 = vadd.f32 %v1517, %v1617
    %v1619 = vpop.f32.mrb[0].mxu0
    %v1620 = vpop.f32.mrb[0].mxu0
    %v1621 = vadd.f32 %v1517, %v1620
    %v1622 = vpop.f32.mrb[0].mxu0
    %1623 = vmatprep.mubr.bf16.mxu0 0
    %1624 = vmatmul.mubr.bf16.gmra.mrb[0].mxu0 %v1495
    %v1625 = vpop.f32.mrb[0].mxu0
    %v1626 = vadd.f32 %v1517, %v1625
    %v1627 = vpop.f32.mrb[0].mxu0
    %v1628 = vpop.f32.mrb[0].mxu0
    %v1629 = vadd.f32 %v1517, %v1628
    %v1630 = vpop.f32.mrb[0].mxu0
    %1631 = vdwg.mxu0
    %1632 = vst [vmem:[#allocation9] sm:$0xff] %v1602
    %1633 = vst [vmem:[#allocation9 + $0x8] sm:$0xff] %v1605
    %1634 = vst [vmem:[#allocation9 + $0x10] sm:$0xff] %v1610
    %1635 = vst [vmem:[#allocation9 + $0x18] sm:$0xff] %v1613
    %1636 = vst [vmem:[#allocation9 + $0x20] sm:$0xff] %v1618
    %1637 = vst [vmem:[#allocation9 + $0x28] sm:$0xff] %v1621
    %1638 = vst [vmem:[#allocation9 + $0x30] sm:$0xff] %v1626
    %1639 = vst [vmem:[#allocation9 + $0x38] sm:$0xff] %v1629
    // Predicated region
    $region42: #{tpu_custom_call.1} parent=1 // pred_check
      _
    $region43: #{tpu_custom_call.1} parent=1 // pred_check_branch
      %1641 = sbr.rel (0) target = $region45
    $region44: #{tpu_custom_call.1} parent=1 // pred_region
      %s1643 = ssub.s32 1024, 1024
      %1644 = vsyncadd [#allocation6], %s1643
      %s1645 = sshll.u32 [#allocation9], 4
      %s1646 = int_to_ptr.vmem [resolvable:$true] %s1645
      %1651 = dma.vmem_to_hbm [thread:$0]  %s1646, 1024, %s7, [#allocation6], 128, 128, 8
    $region45: #{tpu_custom_call.1} parent=1 // pred_fallthru
      _
    // Predicated region
    $region46: #{tpu_custom_call.1} parent=1 // pred_check
      _
    $region47: #{tpu_custom_call.1} parent=1 // pred_check_branch
      %1653 = sbr.rel (0) target = $region49
    $region48: #{tpu_custom_call.1} parent=1 // pred_region
      %1654 = dma.done [#allocation6], 1024
    $region49: #{tpu_custom_call.1} parent=1 // pred_fallthru
      _
    %1655 = vsyncpa [#allocation5], 1
    %1656 = vsyncpa [#allocation8], 1
    %1657 = vsyncpa [#allocation6], 1

</llo_original>
